<compile_context>
chip_gen: v7x
topology: tpu7x:2x2x1
jax: 0.10.0
libtpu: 0.0.40
codegen_flags: <defaults>
</compile_context>

<pallas_src>
import functools

import jax
import jax.numpy as jnp
from jax.experimental import pallas as pl
from jax.experimental.pallas import tpu as pltpu


def _embed_kernel(x_ref, text_ref, w_ref, gb_ref, exp_ref, out_ref, *, x_lanes):
    """One feature tile: Linear -> BN(train) -> LeakyReLU(0.2) -> x16 broadcast.

    x_ref   : (B, C*16)        flattened x, VMEM-resident (used at step 0 only)
    text_ref: (B, size_in)     VMEM-resident
    w_ref   : (size_in, TILE)  this step's weight columns (C-prepadded layout)
    gb_ref  : (2, TILE)        [gamma; beta] for this tile
    exp_ref : (TILE, TILE*16)  0/1 broadcast matrix, VMEM-resident
    out_ref : (B, TILE*16)     lane-dense output block
    """
    # Linear.  Bias intentionally omitted: training-mode BN's batch-mean
    # subtraction cancels a constant per-feature bias exactly.
    z = jnp.dot(text_ref[...], w_ref[...], preferred_element_type=jnp.float32)

    # BatchNorm1d (training): batch mean, biased variance (one pass), eps=1e-5,
    # normalize + affine folded into a single FMA per element.
    mean = jnp.mean(z, axis=0, keepdims=True)
    var = jnp.mean(z * z, axis=0, keepdims=True) - mean * mean
    inv = jax.lax.rsqrt(var + 1e-5)
    gamma = gb_ref[0:1, :]
    beta = gb_ref[1:2, :]
    scale = gamma * inv
    shift = beta - mean * scale
    y = z * scale + shift

    # LeakyReLU(0.2): one VPU max, no compare+select.
    y = jnp.maximum(y, 0.2 * y)

    # Fused 4x4 spatial broadcast -> lane-dense block:
    #   out[b, c*16 + s] = y[b, c]
    # via the resident 0/1 expansion matrix (exact: one nonzero term per lane).
    y = y.astype(exp_ref.dtype)
    bcast = jnp.dot(y, exp_ref[...], preferred_element_type=jnp.float32)
    out_ref[...] = bcast.astype(out_ref.dtype)

    # Fold torch.cat([x, embed], 1): the first C feature columns are dummy
    # zero-weight pads, so block 0's first C*16 lanes belong to x.
    @pl.when(pl.program_id(0) == 0)
    def _():
        out_ref[:, :x_lanes] = x_ref[...].astype(out_ref.dtype)


def _pick_tile(n_total, target):
    """Largest feature tile that divides n_total, is a multiple of 128 and
    is <= target (keeps every BlockSpec lane dim 128-aligned)."""
    best = n_total  # fallback: single full-width block (full-dim blocks are legal)
    for d in range(128, min(target, n_total) + 1, 128):
        if n_total % d == 0:
            best = d
    # TODO(synk): support awkward channel counts (no 128-multiple divisor) with
    # a masked remainder tile instead of falling back to one full-width block.
    return best


def _vmem_limit_bytes():
    """Explicit scoped-VMEM limit: ~7/8 of physical VMEM (per review: ~112 MiB
    on 128 MiB v5e/v6e, ~56 MiB on v7x's 64 MiB)."""
    try:
        cap = int(pltpu.get_tpu_info().vmem_capacity_bytes)
    except Exception:  # conservative fallback if the query is unavailable
        cap = 64 * 1024 * 1024
    return (cap * 7) // 8


def embedding_forward(x, text, w, b, gamma, beta, *, tile_features=128,
                      matmul_dtype=jnp.bfloat16):
    """Full Embedding.forward: Linear+BN(train)+LeakyReLU+broadcast+concat, fused.

    tile_features: feature-tile target.  Review guidance: <=128-256 on v7x
      (64 MiB VMEM; prefer multiples of 256 for its 2x256 MXU), up to 512 on
      v5e/v6e (128 MiB VMEM; multiples of 128 for v5e's 4x128 MXU).
    matmul_dtype: operand dtype for the two MXU matmuls.  bf16 halves DMA bytes
      and MXU passes; BN/LeakyReLU math stays f32.  Use jnp.float32 for
      bit-tight parity with an f32 reference.
    """
    del b  # Cancelled exactly by training-mode BatchNorm (see kernel note).
    # TODO(synk): eval-mode BN (running stats) and running-stat updates are not
    # implemented; training-mode batch statistics are assumed.
    B, C, H, W = x.shape                   # H == W == 4 per repeat(4, 4, 1, 1)
    spatial = H * W
    size_in, size_out = w.shape
    n_total = C + size_out                 # output channels after the concat
    x_lanes = C * spatial

    tile = _pick_tile(n_total, tile_features)
    n_tiles = n_total // tile
    assert tile * spatial >= x_lanes, "x channels must fit inside feature tile 0"

    # Prepend C dummy (zero-weight, gamma=1, beta=0) feature columns so the
    # embedding's feature tiles line up with the concatenated channel layout;
    # their (zero) outputs are overwritten with x by grid step 0.  These are
    # tiny one-off XLA ops on parameter-sized arrays.
    w_pad = jnp.concatenate(
        [jnp.zeros((size_in, C), w.dtype), w], axis=1).astype(matmul_dtype)
    gamma_pad = jnp.concatenate([jnp.ones((C,), jnp.float32),
                                 gamma.astype(jnp.float32)])
    beta_pad = jnp.concatenate([jnp.zeros((C,), jnp.float32),
                                beta.astype(jnp.float32)])
    gb_pad = jnp.stack([gamma_pad, beta_pad], axis=0)           # (2, n_total)

    # 0/1 spatial-broadcast matrix, identical for every tile: built once here,
    # DMA'd once (constant index_map), kept VMEM-resident.
    expand = jnp.repeat(jnp.eye(tile, dtype=jnp.float32), spatial,
                        axis=1).astype(matmul_dtype)            # (tile, tile*16)

    text_c = text.astype(matmul_dtype)
    x_flat = x.reshape(B, x_lanes)

    out = pl.pallas_call(
        functools.partial(_embed_kernel, x_lanes=x_lanes),
        out_shape=jax.ShapeDtypeStruct((B, n_total * spatial), x.dtype),
        grid=(n_tiles,),
        in_specs=[
            pl.BlockSpec((B, x_lanes), lambda j: (0, 0)),            # resident
            pl.BlockSpec((B, size_in), lambda j: (0, 0)),            # resident
            pl.BlockSpec((size_in, tile), lambda j: (0, j)),         # pipelined
            pl.BlockSpec((2, tile), lambda j: (0, j)),               # pipelined
            pl.BlockSpec((tile, tile * spatial), lambda j: (0, 0)),  # resident
        ],
        out_specs=pl.BlockSpec((B, tile * spatial), lambda j: (0, j)),
        compiler_params=pltpu.CompilerParams(
            dimension_semantics=("parallel",),   # v7x dual-TC; no-op on v5e/v6e
            vmem_limit_bytes=_vmem_limit_bytes()),
    )(x_flat, text_c, w_pad, gb_pad, expand)

    # Metadata-only reshape: (B, (C+size_out)*16) -> (B, C+size_out, 4, 4).
    return out.reshape(B, n_total, H, W)


def _reference(x, text, w, b, gamma, beta):
    """Pure-JAX reference of the PyTorch math (training-mode BatchNorm)."""
    z = text @ w + b
    mu = z.mean(0, keepdims=True)
    var = ((z - mu) ** 2).mean(0, keepdims=True)
    y = gamma * (z - mu) / jnp.sqrt(var + 1e-5) + beta
    y = jnp.where(y > 0, y, 0.2 * y)
    B, _, H, W = x.shape
    size_out = w.shape[1]
    bcast = jnp.broadcast_to(y[:, :, None, None], (B, size_out, H, W))
    return jnp.concatenate([x, bcast.astype(x.dtype)], axis=1)


if __name__ == "__main__":
    # Small deterministic shapes consistent with the module: x must be
    # (B, C, 4, 4) for the channel concat; C + size_out = 256 so the demo
    # exercises a 2-step feature grid with TILE = 128.
    B, C = 8, 4
    size_in, size_out = 32, 252

    key = jax.random.PRNGKey(0)
    k_x, k_t, k_w, k_b, k_g, k_be = jax.random.split(key, 6)

    x = jax.random.normal(k_x, (B, C, 4, 4), dtype=jnp.float32)
    text = jax.random.normal(k_t, (B, size_in), dtype=jnp.float32)

    # Deterministic parameter init (Linear weight/bias, BN gamma/beta).
    w = jax.random.normal(k_w, (size_in, size_out), dtype=jnp.float32) * 0.1
    b = jax.random.normal(k_b, (size_out,), dtype=jnp.float32) * 0.1
    gamma = 1.0 + 0.1 * jax.random.normal(k_g, (size_out,), dtype=jnp.float32)
    beta = 0.1 * jax.random.normal(k_be, (size_out,), dtype=jnp.float32)

    ref = _reference(x, text, w, b, gamma, beta)

    # Exact-dtype path: f32 MXU operands -> tight check against the reference.
    out_f32 = embedding_forward(x, text, w, b, gamma, beta,
                                tile_features=128, matmul_dtype=jnp.float32)
    out_f32 = jax.block_until_ready(out_f32)
    assert out_f32.shape == (B, C + size_out, 4, 4), out_f32.shape
    assert out_f32.dtype == x.dtype
    assert jnp.allclose(out_f32, ref, atol=3e-5, rtol=3e-5)

    # Production path: bf16 MXU operands (default) -> loose sanity check.
    out_bf16 = embedding_forward(x, text, w, b, gamma, beta, tile_features=128)
    out_bf16 = jax.block_until_ready(out_bf16)
    assert out_bf16.shape == (B, C + size_out, 4, 4), out_bf16.shape
    assert jnp.allclose(out_bf16, ref, atol=1e-1, rtol=1e-1)

    print("KERNEL_OK")
</pallas_src>

<mosaic_0001>
module attributes {stable_mosaic.version = 11 : i64} {
  func.func @_embed_kernel(%arg0: i32, %arg1: memref<8x64xf32, #tpu.memory_space<vmem>>, %arg2: memref<8x32xf32, #tpu.memory_space<vmem>>, %arg3: memref<32x128xf32, #tpu.memory_space<vmem>>, %arg4: memref<2x128xf32, #tpu.memory_space<vmem>>, %arg5: memref<128x2048xf32, #tpu.memory_space<vmem>>, %arg6: memref<8x2048xf32, #tpu.memory_space<vmem>>) attributes {dimension_semantics = [#tpu.dimension_semantics<parallel>], iteration_bounds = array<i64: 2>, scalar_prefetch = 0 : i64, scratch_operands = 0 : i64, tpu.core_type = #tpu.core_type<tc>, window_params = [{pipeline_mode = #tpu.pipeline_mode<synchronous>, transform_indices = @transform_0, window_bounds = array<i64: 8, 64>}, {pipeline_mode = #tpu.pipeline_mode<synchronous>, transform_indices = @transform_1, window_bounds = array<i64: 8, 32>}, {transform_indices = @transform_2, window_bounds = array<i64: 32, 128>}, {transform_indices = @transform_3, window_bounds = array<i64: 2, 128>}, {pipeline_mode = #tpu.pipeline_mode<synchronous>, transform_indices = @transform_4, window_bounds = array<i64: 128, 2048>}, {transform_indices = @transform_5, window_bounds = array<i64: 8, 2048>}]} {
    %c0 = arith.constant 0 : index
    %c0_0 = arith.constant 0 : index
    %0 = vector.load %arg2[%c0, %c0_0] : memref<8x32xf32, #tpu.memory_space<vmem>>, vector<8x32xf32>
    %c0_1 = arith.constant 0 : index
    %c0_2 = arith.constant 0 : index
    %1 = vector.load %arg3[%c0_1, %c0_2] : memref<32x128xf32, #tpu.memory_space<vmem>>, vector<32x128xf32>
    %cst = arith.constant dense<0.000000e+00> : vector<8x128xf32>
    %2 = tpu.matmul %0, %1, %cst {dimension_numbers = #tpu.dot_dimension_numbers<[1], [0], [0], [1], [0, 0, 1, 1], [], []>} : vector<8x32xf32>, vector<32x128xf32>, vector<8x128xf32> -> vector<8x128xf32>
    %cst_3 = arith.constant dense<0.000000e+00> : vector<128xf32>
    %3 = vector.multi_reduction <add>, %2, %cst_3 [0] : vector<8x128xf32> to vector<128xf32>
    %4 = vector.shape_cast %3 : vector<128xf32> to vector<1x128xf32>
    %cst_4 = arith.constant 8.000000e+00 : f32
    %5 = vector.broadcast %cst_4 : f32 to vector<1x128xf32>
    %6 = arith.divf %4, %5 : vector<1x128xf32>
    %7 = arith.mulf %2, %2 : vector<8x128xf32>
    %cst_5 = arith.constant dense<0.000000e+00> : vector<128xf32>
    %8 = vector.multi_reduction <add>, %7, %cst_5 [0] : vector<8x128xf32> to vector<128xf32>
    %9 = vector.shape_cast %8 : vector<128xf32> to vector<1x128xf32>
    %cst_6 = arith.constant 8.000000e+00 : f32
    %10 = vector.broadcast %cst_6 : f32 to vector<1x128xf32>
    %11 = arith.divf %9, %10 : vector<1x128xf32>
    %12 = arith.mulf %6, %6 : vector<1x128xf32>
    %13 = arith.subf %11, %12 : vector<1x128xf32>
    %cst_7 = arith.constant 9.99999974E-6 : f32
    %14 = vector.broadcast %cst_7 : f32 to vector<1x128xf32>
    %15 = arith.addf %13, %14 : vector<1x128xf32>
    %16 = math.rsqrt %15 : vector<1x128xf32>
    %c0_8 = arith.constant 0 : index
    %c0_9 = arith.constant 0 : index
    %17 = vector.load %arg4[%c0_8, %c0_9] : memref<2x128xf32, #tpu.memory_space<vmem>>, vector<1x128xf32>
    %c1 = arith.constant 1 : index
    %c0_10 = arith.constant 0 : index
    %18 = vector.load %arg4[%c1, %c0_10] : memref<2x128xf32, #tpu.memory_space<vmem>>, vector<1x128xf32>
    %19 = arith.mulf %17, %16 : vector<1x128xf32>
    %20 = arith.mulf %6, %19 : vector<1x128xf32>
    %21 = arith.subf %18, %20 : vector<1x128xf32>
    %22 = vector.broadcast %19 : vector<1x128xf32> to vector<8x128xf32>
    %23 = arith.mulf %2, %22 : vector<8x128xf32>
    %24 = vector.broadcast %21 : vector<1x128xf32> to vector<8x128xf32>
    %25 = arith.addf %23, %24 : vector<8x128xf32>
    %cst_11 = arith.constant 2.000000e-01 : f32
    %26 = vector.broadcast %cst_11 : f32 to vector<8x128xf32>
    %27 = arith.mulf %26, %25 : vector<8x128xf32>
    %28 = arith.maximumf %25, %27 : vector<8x128xf32>
    %c0_12 = arith.constant 0 : index
    %c0_13 = arith.constant 0 : index
    %29 = vector.load %arg5[%c0_12, %c0_13] : memref<128x2048xf32, #tpu.memory_space<vmem>>, vector<128x2048xf32>
    %cst_14 = arith.constant dense<0.000000e+00> : vector<8x2048xf32>
    %30 = tpu.matmul %28, %29, %cst_14 {dimension_numbers = #tpu.dot_dimension_numbers<[1], [0], [0], [1], [0, 0, 1, 1], [], []>} : vector<8x128xf32>, vector<128x2048xf32>, vector<8x2048xf32> -> vector<8x2048xf32>
    %c0_15 = arith.constant 0 : index
    %c0_16 = arith.constant 0 : index
    %31 = vector.load %arg6[%c0_15, %c0_16] : memref<8x2048xf32, #tpu.memory_space<vmem>>, vector<8x2048xf32>
    tpu.vector_store %arg6[%c0_15, %c0_16], %30 {strides = array<i32>} : memref<8x2048xf32, #tpu.memory_space<vmem>>, vector<8x2048xf32>,
    %c0_i32 = arith.constant 0 : i32
    %32 = arith.cmpi eq, %arg0, %c0_i32 : i32
    %33 = arith.extui %32 : i1 to i32
    %c0_i32_17 = arith.constant 0 : i32
    %34 = arith.cmpi ne, %33, %c0_i32_17 : i32
    scf.if %34 {
      %c0_18 = arith.constant 0 : index
      %c0_19 = arith.constant 0 : index
      %35 = vector.load %arg1[%c0_18, %c0_19] : memref<8x64xf32, #tpu.memory_space<vmem>>, vector<8x64xf32>
      %c0_20 = arith.constant 0 : index
      %c0_21 = arith.constant 0 : index
      %36 = vector.load %arg6[%c0_20, %c0_21] : memref<8x2048xf32, #tpu.memory_space<vmem>>, vector<8x64xf32>
      tpu.vector_store %arg6[%c0_20, %c0_21], %35 {strides = array<i32>} : memref<8x2048xf32, #tpu.memory_space<vmem>>, vector<8x64xf32>,
    } else {
    }
    return
  }
  func.func @transform_0(%arg0: i32) -> (i32, i32) {
    %c0_i32 = arith.constant 0 : i32
    %c0_i32_0 = arith.constant 0 : i32
    %c0_i32_1 = arith.constant 0 : i32
    return %c0_i32, %c0_i32_0 : i32, i32
  }
  func.func @transform_1(%arg0: i32) -> (i32, i32) {
    %c0_i32 = arith.constant 0 : i32
    %c0_i32_0 = arith.constant 0 : i32
    %c0_i32_1 = arith.constant 0 : i32
    return %c0_i32, %c0_i32_0 : i32, i32
  }
  func.func @transform_2(%arg0: i32) -> (i32, i32) {
    %c0_i32 = arith.constant 0 : i32
    %c0_i32_0 = arith.constant 0 : i32
    return %c0_i32, %arg0 : i32, i32
  }
  func.func @transform_3(%arg0: i32) -> (i32, i32) {
    %c0_i32 = arith.constant 0 : i32
    %c0_i32_0 = arith.constant 0 : i32
    return %c0_i32, %arg0 : i32, i32
  }
  func.func @transform_4(%arg0: i32) -> (i32, i32) {
    %c0_i32 = arith.constant 0 : i32
    %c0_i32_0 = arith.constant 0 : i32
    %c0_i32_1 = arith.constant 0 : i32
    return %c0_i32, %c0_i32_0 : i32, i32
  }
  func.func @transform_5(%arg0: i32) -> (i32, i32) {
    %c0_i32 = arith.constant 0 : i32
    %c0_i32_0 = arith.constant 0 : i32
    return %c0_i32, %arg0 : i32, i32
  }
}

</mosaic_0001>

<llo_original>
// kernel: tpu_custom_call.1
$region0: #{tpu_custom_call.1}
  #allocation0 [shape = 'u32[]', space=smem, size = 0x4, offset = 0x4, fixed_abs, tag = 'smem constant byte address 0x4 - core index']
  #allocation1 [shape = 'u32[144,128]{1,0:T(1,128)}', space=vmem, size = 0x12000, scoped, tag = 'internal scratch']
  %s0 = inlined_call_operand.hbm [shape: f32[8,64], index: 0, kind: input, shape index: {}]
  %s1 = inlined_call_operand.hbm [shape: f32[8,32], index: 1, kind: input, shape index: {}]
  %s2 = inlined_call_operand.hbm [shape: f32[32,256], index: 2, kind: input, shape index: {}]
  %s3 = inlined_call_operand.vmem [shape: f32[2,256], index: 3, kind: input, shape index: {}]
  %s4 = inlined_call_operand.hbm [shape: f32[128,2048], index: 4, kind: input, shape index: {}]
  %s5 = inlined_call_operand.hbm [shape: f32[8,4096], index: 5, kind: output, shape index: {}]
  %s6 = sld [smem:[#allocation0]]
  $region73: #{tpu_custom_call.1} parent=0
    _
  %s8 = ssub.s32 1, %s6
  %s9 = scalar_select 0, %s8, %s6
  $region1: #{tpu_custom_call.1} parent=0
    #allocation2 [shape = 'u8[4096]{0}', space=vmem, size = 0x1000, scoped, tag = 'input window, operand 0, single buffered']
    #allocation3 [shape = 's32[2]{0}', space=sflag, size = 0x8, scoped, tag = 'scoped memory for tpu_custom_call.1']
    #allocation4 [shape = 's32[2]{0}', space=sflag, size = 0x8, scoped, tag = 'scoped memory for tpu_custom_call.1']
    #allocation5 [shape = 'u8[4096]{0}', space=vmem, size = 0x1000, scoped, tag = 'input window, operand 1, single buffered']
    #allocation6 [shape = 's32[1]{0}', space=sflag, size = 0x4, scoped, tag = 'scoped memory for tpu_custom_call.1']
    #allocation7 [shape = 'u8[32768]{0}', space=vmem, size = 0x8000, scoped, tag = 'input window, operand 2']
    #allocation8 [shape = 'u8[1048576]{0}', space=vmem, size = 0x100000, scoped, tag = 'input window, operand 4, single buffered']
    #allocation9 [shape = 'u8[131072]{0}', space=vmem, size = 0x20000, scoped, tag = 'output window, operand 0']
    %10 = vsyncpa [#allocation3], 0
    %11 = vsyncpa [#allocation6], 0
    %12 = vsyncpa [#allocation4], 0
    %s13 = scalar_lea.sflag [#allocation4], 1
    %14 = vsyncpa %s13, 0
    loop: start=0, step=1, limit=4
    $region2: #{tpu_custom_call.1} parent=1 // loop_pre_header
      _
    $region3: #{tpu_custom_call.1} parent=1 // loop_header
      %s16 = sphi 0, %s20
      %p17 = scmp.ge.s32.totalorder %s16, 4
      %s24 = sphi 0, %s24
      %s26 = sphi 0, %s24
      %s27 = sphi 0, %s26
      %s41 = sphi 0, %s27
      %s45 = sphi 0, %s45
      %s47 = sphi 0, %s45
      %s48 = sphi 0, %s47
      %s62 = sphi 0, %s48
      %s68 = sphi 0, %s70
      %s71 = sphi 0, %s68
      %s72 = sphi 0, %s71
      %s88 = sphi 0, %s72
      %s94 = sphi 0, %s96
      %s97 = sphi 0, %s94
      %s98 = sphi 0, %s97
      %s114 = sphi 0, %s98
      %s118 = sphi 0, %s118
      %s120 = sphi 0, %s118
      %s121 = sphi 0, %s120
      %s135 = sphi 0, %s121
      %s141 = sphi 0, %s143
      %s144 = sphi 0, %s141
      %s145 = sphi 0, %s144
      %s161 = sphi 0, %s145
    $region4: #{tpu_custom_call.1} parent=1 // loop_header_branch
      %19 = sbr.rel (%p17) target = $region8
    $region5: #{tpu_custom_call.1} parent=1 // loop_body
      %s21 = ssub.s32 %s16, 1
      %s22 = ssub.s32 %s16, 2
      %s23 = sadd.s32 %s16, 1
      %s25 = sadd.s32 %s24, 1
      %p28 = scmp.eq.s32.totalorder %s16, 1
      %p29 = scmp.ne.s32.totalorder %s24, %s26
      %p30 = scmp.eq.s32.totalorder %s16, 0
      %p31 = por %p29, %p30
      %p32 = scmp.ne.s32.totalorder %s24, %s26
      %p33 = scmp.eq.s32.totalorder %s21, 1
      %p34 = por %p32, %p33
      %p35 = scmp.ne.s32.totalorder %s26, %s27
      %p36 = scmp.eq.s32.totalorder %s21, 0
      %p37 = por %p35, %p36
      %p38 = scmp.ne.s32.totalorder %s26, %s27
      %p39 = scmp.eq.s32.totalorder %s22, 1
      %p40 = por %p38, %p39
      %p42 = scmp.ne.s32.totalorder %s27, %s41
      %p43 = scmp.eq.s32.totalorder %s22, 0
      %p44 = por %p42, %p43
      %s46 = sadd.s32 %s45, 1
      %p49 = scmp.eq.s32.totalorder %s16, 1
      %p50 = scmp.ne.s32.totalorder %s45, %s47
      %p51 = scmp.eq.s32.totalorder %s16, 0
      %p52 = por %p50, %p51
      %p53 = scmp.ne.s32.totalorder %s45, %s47
      %p54 = scmp.eq.s32.totalorder %s21, 1
      %p55 = por %p53, %p54
      %p56 = scmp.ne.s32.totalorder %s47, %s48
      %p57 = scmp.eq.s32.totalorder %s21, 0
      %p58 = por %p56, %p57
      %p59 = scmp.ne.s32.totalorder %s47, %s48
      %p60 = scmp.eq.s32.totalorder %s22, 1
      %p61 = por %p59, %p60
      %p63 = scmp.ne.s32.totalorder %s48, %s62
      %p64 = scmp.eq.s32.totalorder %s22, 0
      %p65 = por %p63, %p64
      %s66 = ssub.s32 %s16, %s23
      %p67 = scmp.eq.s32.totalorder %s66, 0
      %s69 = sadd.s32 %s68, 1
      %s70 = scalar_select %p67, %s68, %s69
      %p73 = pneg %p67
      %p74 = scmp.eq.s32.totalorder %s16, 1
      %p75 = por %p73, %p74
      %p76 = scmp.ne.s32.totalorder %s68, %s71
      %p77 = scmp.eq.s32.totalorder %s16, 0
      %p78 = por %p76, %p77
      %p79 = scmp.ne.s32.totalorder %s68, %s71
      %p80 = scmp.eq.s32.totalorder %s21, 1
      %p81 = por %p79, %p80
      %p82 = scmp.ne.s32.totalorder %s71, %s72
      %p83 = scmp.eq.s32.totalorder %s21, 0
      %p84 = por %p82, %p83
      %p85 = scmp.ne.s32.totalorder %s71, %s72
      %p86 = scmp.eq.s32.totalorder %s22, 1
      %p87 = por %p85, %p86
      %p89 = scmp.ne.s32.totalorder %s72, %s88
      %p90 = scmp.eq.s32.totalorder %s22, 0
      %p91 = por %p89, %p90
      %s92 = ssub.s32 %s16, %s23
      %p93 = scmp.eq.s32.totalorder %s92, 0
      %s95 = sadd.s32 %s94, 1
      %s96 = scalar_select %p93, %s94, %s95
      %p99 = pneg %p93
      %p100 = scmp.eq.s32.totalorder %s16, 1
      %p101 = por %p99, %p100
      %p102 = scmp.ne.s32.totalorder %s94, %s97
      %p103 = scmp.eq.s32.totalorder %s16, 0
      %p104 = por %p102, %p103
      %p105 = scmp.ne.s32.totalorder %s94, %s97
      %p106 = scmp.eq.s32.totalorder %s21, 1
      %p107 = por %p105, %p106
      %p108 = scmp.ne.s32.totalorder %s97, %s98
      %p109 = scmp.eq.s32.totalorder %s21, 0
      %p110 = por %p108, %p109
      %p111 = scmp.ne.s32.totalorder %s97, %s98
      %p112 = scmp.eq.s32.totalorder %s22, 1
      %p113 = por %p111, %p112
      %p115 = scmp.ne.s32.totalorder %s98, %s114
      %p116 = scmp.eq.s32.totalorder %s22, 0
      %p117 = por %p115, %p116
      %s119 = sadd.s32 %s118, 1
      %p122 = scmp.eq.s32.totalorder %s16, 1
      %p123 = scmp.ne.s32.totalorder %s118, %s120
      %p124 = scmp.eq.s32.totalorder %s16, 0
      %p125 = por %p123, %p124
      %p126 = scmp.ne.s32.totalorder %s118, %s120
      %p127 = scmp.eq.s32.totalorder %s21, 1
      %p128 = por %p126, %p127
      %p129 = scmp.ne.s32.totalorder %s120, %s121
      %p130 = scmp.eq.s32.totalorder %s21, 0
      %p131 = por %p129, %p130
      %p132 = scmp.ne.s32.totalorder %s120, %s121
      %p133 = scmp.eq.s32.totalorder %s22, 1
      %p134 = por %p132, %p133
      %p136 = scmp.ne.s32.totalorder %s121, %s135
      %p137 = scmp.eq.s32.totalorder %s22, 0
      %p138 = por %p136, %p137
      %s139 = ssub.s32 %s16, %s23
      %p140 = scmp.eq.s32.totalorder %s139, 0
      %s142 = sadd.s32 %s141, 1
      %s143 = scalar_select %p140, %s141, %s142
      %p146 = pneg %p140
      %p147 = scmp.eq.s32.totalorder %s16, 1
      %p148 = por %p146, %p147
      %p149 = scmp.ne.s32.totalorder %s141, %s144
      %p150 = scmp.eq.s32.totalorder %s16, 0
      %p151 = por %p149, %p150
      %p152 = scmp.ne.s32.totalorder %s141, %s144
      %p153 = scmp.eq.s32.totalorder %s21, 1
      %p154 = por %p152, %p153
      %p155 = scmp.ne.s32.totalorder %s144, %s145
      %p156 = scmp.eq.s32.totalorder %s21, 0
      %p157 = por %p155, %p156
      %p158 = scmp.ne.s32.totalorder %s144, %s145
      %p159 = scmp.eq.s32.totalorder %s22, 1
      %p160 = por %p158, %p159
      %p162 = scmp.ne.s32.totalorder %s145, %s161
      %p163 = scmp.eq.s32.totalorder %s22, 0
      %p164 = por %p162, %p163
      %p165 = scmp.le.s32.totalorder 1, %s16
      %p166 = scmp.lt.s32.totalorder %s16, 3
      %p167 = pnand %p165, %p166
      %p168 = pneg %p167
      // Predicated region
      $region9: #{tpu_custom_call.1} parent=5 // pred_check
        _
      $region10: #{tpu_custom_call.1} parent=5 // pred_check_branch
        %170 = sbr.rel (%p167) target = $region12
      $region11: #{tpu_custom_call.1} parent=5 // pred_region
        %s171 = ssub.s32 %s16, 1
        // Predicated region
        $region13: #{tpu_custom_call.1} parent=11 // pred_check
          %p172 = pneg %p37
        $region14: #{tpu_custom_call.1} parent=11 // pred_check_branch
          %174 = sbr.rel (%p172) target = $region16
        $region15: #{tpu_custom_call.1} parent=11 // pred_region
          %s176 = ssub.s32 128, 128
          %177 = vsyncadd [#allocation3], %s176
          %s179 = sshll.u32 [#allocation2], 4
          %s180 = int_to_ptr.vmem [resolvable:$true] %s179
          %182 = dma.hbm_to_vmem [thread:$0]  %s0, 128, %s180, [#allocation3]
        $region16: #{tpu_custom_call.1} parent=11 // pred_fallthru
          _
        // Predicated region
        $region17: #{tpu_custom_call.1} parent=11 // pred_check
          %p183 = pneg %p58
        $region18: #{tpu_custom_call.1} parent=11 // pred_check_branch
          %185 = sbr.rel (%p183) target = $region20
        $region19: #{tpu_custom_call.1} parent=11 // pred_region
          %s187 = ssub.s32 128, 128
          %188 = vsyncadd [#allocation6], %s187
          %s190 = sshll.u32 [#allocation5], 4
          %s191 = int_to_ptr.vmem [resolvable:$true] %s190
          %193 = dma.hbm_to_vmem [thread:$0]  %s1, 128, %s191, [#allocation6]
        $region20: #{tpu_custom_call.1} parent=11 // pred_fallthru
          _
        // Predicated region
        $region21: #{tpu_custom_call.1} parent=11 // pred_check
          %p194 = pneg %p131
        $region22: #{tpu_custom_call.1} parent=11 // pred_check_branch
          %196 = sbr.rel (%p194) target = $region24
        $region23: #{tpu_custom_call.1} parent=11 // pred_region
          %s198 = ssub.s32 32768, 32768
          %199 = vsyncadd [#allocation6], %s198
          %s200 = sshll.u32 [#allocation8], 4
          %s201 = int_to_ptr.vmem [resolvable:$true] %s200
          %206 = dma.hbm_to_vmem [thread:$0]  %s4, 32768, %s201, [#allocation6], 2048, 2048, 128
        $region24: #{tpu_custom_call.1} parent=11 // pred_fallthru
          _
      $region12: #{tpu_custom_call.1} parent=5 // pred_fallthru
        _
      %p207 = scmp.lt.s32.totalorder %s16, 2
      // Predicated region
      $region25: #{tpu_custom_call.1} parent=5 // pred_check
        %p208 = pneg %p207
      $region26: #{tpu_custom_call.1} parent=5 // pred_check_branch
        %210 = sbr.rel (%p208) target = $region28
      $region27: #{tpu_custom_call.1} parent=5 // pred_region
        // Predicated region
        $region29: #{tpu_custom_call.1} parent=27 // pred_check
          %p211 = pneg %p78
        $region30: #{tpu_custom_call.1} parent=27 // pred_check_branch
          %213 = sbr.rel (%p211) target = $region32
        $region31: #{tpu_custom_call.1} parent=27 // pred_region
          %s214 = sand.u32 %s16, 1
          %s215 = scalar_lea.sflag [#allocation3], %s214
          %s216 = sand.u32 %s68, 1
          %s217 = smul.addr %s216, 32
          %s218 = scalar_lea.vmem [#allocation7], %s217
          %s220 = ssub.s32 512, 512
          %221 = vsyncadd %s215, %s220
          %s222 = smul.addr %s16, 128
          %s223 = scalar_lea.hbm %s2, %s222
          %s224 = sshll.u32 %s218, 4
          %s225 = int_to_ptr.vmem [resolvable:$true] %s224
          %230 = dma.hbm_to_vmem [thread:$0]  %s223, 512, %s225, %s215, 256, 128, 8
        $region32: #{tpu_custom_call.1} parent=27 // pred_fallthru
          _
        // Predicated region
        $region33: #{tpu_custom_call.1} parent=27 // pred_check
          %p231 = pneg %p104
        $region34: #{tpu_custom_call.1} parent=27 // pred_check_branch
          %233 = sbr.rel (%p231) target = $region36
        $region35: #{tpu_custom_call.1} parent=27 // pred_region
          %p234 = scmp.lt.s32.totalorder %s16, 1
          %s235 = scalar_select %p234, %s16, 1
          %s236 = smul.addr %s235, 2
          %s237 = scalar_lea.vmem %s3, %s236
        $region36: #{tpu_custom_call.1} parent=27 // pred_fallthru
          _
      $region28: #{tpu_custom_call.1} parent=5 // pred_fallthru
        _
      %p238 = scmp.le.s32.totalorder 1, %s16
      %p239 = scmp.lt.s32.totalorder %s16, 3
      %p240 = pnand %p238, %p239
      %p241 = pneg %p240
      // Predicated region
      $region37: #{tpu_custom_call.1} parent=5 // pred_check
        _
      $region38: #{tpu_custom_call.1} parent=5 // pred_check_branch
        %243 = sbr.rel (%p240) target = $region40
      $region39: #{tpu_custom_call.1} parent=5 // pred_region
        %s244 = ssub.s32 %s16, 1
        // Predicated region
        $region41: #{tpu_custom_call.1} parent=39 // pred_check
          %p245 = pneg %p37
        $region42: #{tpu_custom_call.1} parent=39 // pred_check_branch
          %247 = sbr.rel (%p245) target = $region44
        $region43: #{tpu_custom_call.1} parent=39 // pred_region
          %248 = dma.done [#allocation3], 128
        $region44: #{tpu_custom_call.1} parent=39 // pred_fallthru
          _
        // Predicated region
        $region45: #{tpu_custom_call.1} parent=39 // pred_check
          %p249 = pneg %p58
        $region46: #{tpu_custom_call.1} parent=39 // pred_check_branch
          %251 = sbr.rel (%p249) target = $region48
        $region47: #{tpu_custom_call.1} parent=39 // pred_region
          %252 = dma.done [#allocation6], 128
        $region48: #{tpu_custom_call.1} parent=39 // pred_fallthru
          _
        %s253 = sand.u32 %s21, 1
        %s254 = scalar_lea.sflag [#allocation3], %s253
        %s255 = sand.u32 %s71, 1
        %s256 = smul.addr %s255, 32
        %s257 = scalar_lea.vmem [#allocation7], %s256
        // Predicated region
        $region49: #{tpu_custom_call.1} parent=39 // pred_check
          %p258 = pneg %p84
        $region50: #{tpu_custom_call.1} parent=39 // pred_check_branch
          %260 = sbr.rel (%p258) target = $region52
        $region51: #{tpu_custom_call.1} parent=39 // pred_region
          %261 = dma.done %s254, 512
        $region52: #{tpu_custom_call.1} parent=39 // pred_fallthru
          _
        // Predicated region
        $region53: #{tpu_custom_call.1} parent=39 // pred_check
          %p262 = pneg %p131
        $region54: #{tpu_custom_call.1} parent=39 // pred_check_branch
          %264 = sbr.rel (%p262) target = $region56
        $region55: #{tpu_custom_call.1} parent=39 // pred_region
          %265 = dma.done [#allocation6], 32768
        $region56: #{tpu_custom_call.1} parent=39 // pred_fallthru
          _
        %p266 = pneg %p37
        %p267 = pneg %p34
        %p268 = pneg %p58
        %p269 = pneg %p55
        %s270 = sand.u32 %s21, 1
        %s271 = scalar_lea.sflag [#allocation3], %s270
        %s272 = sand.u32 %s71, 1
        %s273 = smul.addr %s272, 32
        %s274 = scalar_lea.vmem [#allocation7], %s273
        %p275 = pneg %p84
        %p276 = pneg %p81
        %p277 = scmp.lt.s32.totalorder %s21, 1
        %s278 = scalar_select %p277, %s21, 1
        %s279 = smul.addr %s278, 2
        %s280 = scalar_lea.vmem %s3, %s279
        %p281 = pneg %p110
        %p282 = pneg %p107
        %p283 = pneg %p131
        %p284 = pneg %p128
        %p285 = pneg %p157
        %p286 = pneg %p154
        %s287 = sand.u32 %s144, 1
        %s288 = scalar_lea.sflag [#allocation4], %s287
        %s289 = sand.u32 %s144, 1
        %s290 = smul.addr %s289, 128
        %s291 = scalar_lea.vmem [#allocation9], %s290
        %p292 = scmp.lt.s32.totalorder %s21, 1
        %s293 = scalar_select %p292, %s21, 1
        %s294 = smul.addr %s293, 2
        %s295 = scalar_lea.vmem %s3, %s294
        %s296 = smul.u32 16, %s21
        %v297 = vld [vmem:[#allocation5] sm:$0xff]
        %v298 = vld [vmem:[%s257] sm:$0xff]
        %v299 = vld [vmem:[%s257 + $0x8] sm:$0xff]
        %v300 = vld [vmem:[%s257 + $0x10] sm:$0xff]
        %v301 = vld [vmem:[%s257 + $0x18] sm:$0xff]
        %vm302 = vcmask 261120
        %v304 = vsel %vm302, %v297, 0
        %306 = vmatprep.subr.mxu0 0.0
        %307 = vmatpush1.msra.mxu0 %v298
        %308 = vmatprep.subr.mxu0 0.0
        %309 = vmatpush1.msra.mxu0 %v299
        %310 = vmatprep.subr.mxu0 0.0
        %311 = vmatpush1.msra.mxu0 %v300
        %312 = vmatprep.subr.mxu0 0.0
        %313 = vmatpush1.msra.mxu0 %v301
        %314 = vmatprep.subr.mxu0 0.0
        %315 = vmatpush1.msra.mxu0 0.0
        %316 = vmatprep.subr.mxu0 0.0
        %317 = vmatpush1.msra.mxu0 0.0
        %318 = vmatprep.subr.mxu0 0.0
        %319 = vmatpush1.msra.mxu0 0.0
        %320 = vmatprep.subr.mxu0 0.0
        %321 = vmatpush1.msra.mxu0 0.0
        %322 = vmatprep.subr.mxu0 0.0
        %323 = vmatpush1.msra.mxu0 0.0
        %324 = vmatprep.subr.mxu0 0.0
        %325 = vmatpush1.msra.mxu0 0.0
        %326 = vmatprep.subr.mxu0 0.0
        %327 = vmatpush1.msra.mxu0 0.0
        %328 = vmatprep.subr.mxu0 0.0
        %329 = vmatpush1.msra.mxu0 0.0
        %330 = vmatprep.subr.mxu0 0.0
        %331 = vmatpush1.msra.mxu0 0.0
        %332 = vmatprep.subr.mxu0 0.0
        %333 = vmatpush1.msra.mxu0 0.0
        %334 = vmatprep.subr.mxu0 0.0
        %335 = vmatpush1.msra.mxu0 0.0
        %336 = vmatprep.subr.mxu0 0.0
        %337 = vmatpush1.msra.mxu0 0.0
        %338 = vmatprep.subr.mxu0 0.0
        %339 = vmatpush1.msra.mxu0 0.0
        %340 = vmatprep.subr.mxu0 0.0
        %341 = vmatpush1.msra.mxu0 0.0
        %342 = vmatprep.subr.mxu0 0.0
        %343 = vmatpush1.msra.mxu0 0.0
        %344 = vmatprep.subr.mxu0 0.0
        %345 = vmatpush1.msra.mxu0 0.0
        %346 = vmatprep.subr.mxu0 0.0
        %347 = vmatpush1.msra.mxu0 0.0
        %348 = vmatprep.subr.mxu0 0.0
        %349 = vmatpush1.msra.mxu0 0.0
        %350 = vmatprep.subr.mxu0 0.0
        %351 = vmatpush1.msra.mxu0 0.0
        %352 = vmatprep.subr.mxu0 0.0
        %353 = vmatpush1.msra.mxu0 0.0
        %354 = vmatprep.subr.mxu0 0.0
        %355 = vmatpush1.msra.mxu0 0.0
        %356 = vmatprep.subr.mxu0 0.0
        %357 = vmatpush1.msra.mxu0 0.0
        %358 = vmatprep.subr.mxu0 0.0
        %359 = vmatpush1.msra.mxu0 0.0
        %360 = vmatprep.subr.mxu0 0.0
        %361 = vmatpush1.msra.mxu0 0.0
        %362 = vmatprep.subr.mxu0 0.0
        %363 = vmatpush1.msra.mxu0 0.0
        %364 = vmatprep.subr.mxu0 0.0
        %365 = vmatpush1.msra.mxu0 0.0
        %366 = vmatprep.subr.mxu0 0.0
        %367 = vmatpush1.msra.mxu0 0.0
        %368 = vmatprep.subr.mxu0 0.0
        %369 = vmatpush1.msra.mxu0 0.0
        %370 = vmatprep.mubr.f32.mxu0 0.0
        %371 = vmatmul.mubr.f32.gmra.mrb[0].mxu0 %v304
        %v372 = vpop.f32.mrb[0].mxu0
        %v373 = vadd.f32 0.0, %v372
        %v374 = vpop.f32.mrb[0].mxu0
        %375 = vdwg.mxu0
        %v376 = vrot.slane %v373, 4
        %v377 = vadd.f32 %v373, %v376
        %v378 = vrot.slane %v377, 2
        %v379 = vadd.f32 %v377, %v378
        %v380 = vrot.slane %v379, 1
        %v381 = vadd.f32 %v379, %v380
        %v382 = vrcp.pop 8.0
        %v383 = vmul.f32 %v381, %v382
        %v384 = vmul.f32 %v373, %v373
        %v385 = vrot.slane %v384, 4
        %v386 = vadd.f32 %v384, %v385
        %v387 = vrot.slane %v386, 2
        %v388 = vadd.f32 %v386, %v387
        %v389 = vrot.slane %v388, 1
        %v390 = vadd.f32 %v388, %v389
        %v391 = vmul.f32 %v390, %v382
        %v392 = vmul.f32 %v383, %v383
        %v393 = vsub.f32 %v391, %v392
        %v394 = vadd.f32 %v393, 1e-05
        %v395 = vrsqrt.pop %v394
        %v396 = vld [vmem:[%s295] sm:$0x1]
        %v397 = vld [vmem:[%s295 + $0x1] sm:$0x1]
        %v398 = vmul.f32 %v396, %v395
        %v399 = vmul.f32 %v383, %v398
        %v400 = vsub.f32 %v397, %v399
        %v401 = vlaneseq
        %v402 = vshrl.u32 %v401, 7
        %v403 = vsub.s32 0, %v402
        %v404 = vrot.slane %v398, %v403
        %v405 = vmul.f32 %v373, %v404
        %v406 = vlaneseq
        %v407 = vshrl.u32 %v406, 7
        %v408 = vsub.s32 0, %v407
        %v409 = vrot.slane %v400, %v408
        %v410 = vadd.f32 %v405, %v409
        %v411 = vmul.f32 %v410, 0.2
        %v412 = vmax.f32 %v410, %v411
        %v413 = vld [vmem:[#allocation8] sm:$0xff]
        %v414 = vld [vmem:[#allocation8 + $0x8] sm:$0xff]
        %v415 = vld [vmem:[#allocation8 + $0x10] sm:$0xff]
        %v416 = vld [vmem:[#allocation8 + $0x18] sm:$0xff]
        %v417 = vld [vmem:[#allocation8 + $0x20] sm:$0xff]
        %v418 = vld [vmem:[#allocation8 + $0x28] sm:$0xff]
        %v419 = vld [vmem:[#allocation8 + $0x30] sm:$0xff]
        %v420 = vld [vmem:[#allocation8 + $0x38] sm:$0xff]
        %v421 = vld [vmem:[#allocation8 + $0x40] sm:$0xff]
        %v422 = vld [vmem:[#allocation8 + $0x48] sm:$0xff]
        %v423 = vld [vmem:[#allocation8 + $0x50] sm:$0xff]
        %v424 = vld [vmem:[#allocation8 + $0x58] sm:$0xff]
        %v425 = vld [vmem:[#allocation8 + $0x60] sm:$0xff]
        %v426 = vld [vmem:[#allocation8 + $0x68] sm:$0xff]
        %v427 = vld [vmem:[#allocation8 + $0x70] sm:$0xff]
        %v428 = vld [vmem:[#allocation8 + $0x78] sm:$0xff]
        %v429 = vld [vmem:[#allocation8 + $0x80] sm:$0xff]
        %v430 = vld [vmem:[#allocation8 + $0x88] sm:$0xff]
        %v431 = vld [vmem:[#allocation8 + $0x90] sm:$0xff]
        %v432 = vld [vmem:[#allocation8 + $0x98] sm:$0xff]
        %v433 = vld [vmem:[#allocation8 + $0xa0] sm:$0xff]
        %v434 = vld [vmem:[#allocation8 + $0xa8] sm:$0xff]
        %v435 = vld [vmem:[#allocation8 + $0xb0] sm:$0xff]
        %v436 = vld [vmem:[#allocation8 + $0xb8] sm:$0xff]
        %v437 = vld [vmem:[#allocation8 + $0xc0] sm:$0xff]
        %v438 = vld [vmem:[#allocation8 + $0xc8] sm:$0xff]
        %v439 = vld [vmem:[#allocation8 + $0xd0] sm:$0xff]
        %v440 = vld [vmem:[#allocation8 + $0xd8] sm:$0xff]
        %v441 = vld [vmem:[#allocation8 + $0xe0] sm:$0xff]
        %v442 = vld [vmem:[#allocation8 + $0xe8] sm:$0xff]
        %v443 = vld [vmem:[#allocation8 + $0xf0] sm:$0xff]
        %v444 = vld [vmem:[#allocation8 + $0xf8] sm:$0xff]
        %v445 = vld [vmem:[#allocation8 + $0x100] sm:$0xff]
        %v446 = vld [vmem:[#allocation8 + $0x108] sm:$0xff]
        %v447 = vld [vmem:[#allocation8 + $0x110] sm:$0xff]
        %v448 = vld [vmem:[#allocation8 + $0x118] sm:$0xff]
        %v449 = vld [vmem:[#allocation8 + $0x120] sm:$0xff]
        %v450 = vld [vmem:[#allocation8 + $0x128] sm:$0xff]
        %v451 = vld [vmem:[#allocation8 + $0x130] sm:$0xff]
        %v452 = vld [vmem:[#allocation8 + $0x138] sm:$0xff]
        %v453 = vld [vmem:[#allocation8 + $0x140] sm:$0xff]
        %v454 = vld [vmem:[#allocation8 + $0x148] sm:$0xff]
        %v455 = vld [vmem:[#allocation8 + $0x150] sm:$0xff]
        %v456 = vld [vmem:[#allocation8 + $0x158] sm:$0xff]
        %v457 = vld [vmem:[#allocation8 + $0x160] sm:$0xff]
        %v458 = vld [vmem:[#allocation8 + $0x168] sm:$0xff]
        %v459 = vld [vmem:[#allocation8 + $0x170] sm:$0xff]
        %v460 = vld [vmem:[#allocation8 + $0x178] sm:$0xff]
        %v461 = vld [vmem:[#allocation8 + $0x180] sm:$0xff]
        %v462 = vld [vmem:[#allocation8 + $0x188] sm:$0xff]
        %v463 = vld [vmem:[#allocation8 + $0x190] sm:$0xff]
        %v464 = vld [vmem:[#allocation8 + $0x198] sm:$0xff]
        %v465 = vld [vmem:[#allocation8 + $0x1a0] sm:$0xff]
        %v466 = vld [vmem:[#allocation8 + $0x1a8] sm:$0xff]
        %v467 = vld [vmem:[#allocation8 + $0x1b0] sm:$0xff]
        %v468 = vld [vmem:[#allocation8 + $0x1b8] sm:$0xff]
        %v469 = vld [vmem:[#allocation8 + $0x1c0] sm:$0xff]
        %v470 = vld [vmem:[#allocation8 + $0x1c8] sm:$0xff]
        %v471 = vld [vmem:[#allocation8 + $0x1d0] sm:$0xff]
        %v472 = vld [vmem:[#allocation8 + $0x1d8] sm:$0xff]
        %v473 = vld [vmem:[#allocation8 + $0x1e0] sm:$0xff]
        %v474 = vld [vmem:[#allocation8 + $0x1e8] sm:$0xff]
        %v475 = vld [vmem:[#allocation8 + $0x1f0] sm:$0xff]
        %v476 = vld [vmem:[#allocation8 + $0x1f8] sm:$0xff]
        %v477 = vld [vmem:[#allocation8 + $0x200] sm:$0xff]
        %v478 = vld [vmem:[#allocation8 + $0x208] sm:$0xff]
        %v479 = vld [vmem:[#allocation8 + $0x210] sm:$0xff]
        %v480 = vld [vmem:[#allocation8 + $0x218] sm:$0xff]
        %v481 = vld [vmem:[#allocation8 + $0x220] sm:$0xff]
        %v482 = vld [vmem:[#allocation8 + $0x228] sm:$0xff]
        %v483 = vld [vmem:[#allocation8 + $0x230] sm:$0xff]
        %v484 = vld [vmem:[#allocation8 + $0x238] sm:$0xff]
        %v485 = vld [vmem:[#allocation8 + $0x240] sm:$0xff]
        %v486 = vld [vmem:[#allocation8 + $0x248] sm:$0xff]
        %v487 = vld [vmem:[#allocation8 + $0x250] sm:$0xff]
        %v488 = vld [vmem:[#allocation8 + $0x258] sm:$0xff]
        %v489 = vld [vmem:[#allocation8 + $0x260] sm:$0xff]
        %v490 = vld [vmem:[#allocation8 + $0x268] sm:$0xff]
        %v491 = vld [vmem:[#allocation8 + $0x270] sm:$0xff]
        %v492 = vld [vmem:[#allocation8 + $0x278] sm:$0xff]
        %v493 = vld [vmem:[#allocation8 + $0x280] sm:$0xff]
        %v494 = vld [vmem:[#allocation8 + $0x288] sm:$0xff]
        %v495 = vld [vmem:[#allocation8 + $0x290] sm:$0xff]
        %v496 = vld [vmem:[#allocation8 + $0x298] sm:$0xff]
        %v497 = vld [vmem:[#allocation8 + $0x2a0] sm:$0xff]
        %v498 = vld [vmem:[#allocation8 + $0x2a8] sm:$0xff]
        %v499 = vld [vmem:[#allocation8 + $0x2b0] sm:$0xff]
        %v500 = vld [vmem:[#allocation8 + $0x2b8] sm:$0xff]
        %v501 = vld [vmem:[#allocation8 + $0x2c0] sm:$0xff]
        %v502 = vld [vmem:[#allocation8 + $0x2c8] sm:$0xff]
        %v503 = vld [vmem:[#allocation8 + $0x2d0] sm:$0xff]
        %v504 = vld [vmem:[#allocation8 + $0x2d8] sm:$0xff]
        %v505 = vld [vmem:[#allocation8 + $0x2e0] sm:$0xff]
        %v506 = vld [vmem:[#allocation8 + $0x2e8] sm:$0xff]
        %v507 = vld [vmem:[#allocation8 + $0x2f0] sm:$0xff]
        %v508 = vld [vmem:[#allocation8 + $0x2f8] sm:$0xff]
        %v509 = vld [vmem:[#allocation8 + $0x300] sm:$0xff]
        %v510 = vld [vmem:[#allocation8 + $0x308] sm:$0xff]
        %v511 = vld [vmem:[#allocation8 + $0x310] sm:$0xff]
        %v512 = vld [vmem:[#allocation8 + $0x318] sm:$0xff]
        %v513 = vld [vmem:[#allocation8 + $0x320] sm:$0xff]
        %v514 = vld [vmem:[#allocation8 + $0x328] sm:$0xff]
        %v515 = vld [vmem:[#allocation8 + $0x330] sm:$0xff]
        %v516 = vld [vmem:[#allocation8 + $0x338] sm:$0xff]
        %v517 = vld [vmem:[#allocation8 + $0x340] sm:$0xff]
        %v518 = vld [vmem:[#allocation8 + $0x348] sm:$0xff]
        %v519 = vld [vmem:[#allocation8 + $0x350] sm:$0xff]
        %v520 = vld [vmem:[#allocation8 + $0x358] sm:$0xff]
        %v521 = vld [vmem:[#allocation8 + $0x360] sm:$0xff]
        %v522 = vld [vmem:[#allocation8 + $0x368] sm:$0xff]
        %v523 = vld [vmem:[#allocation8 + $0x370] sm:$0xff]
        %v524 = vld [vmem:[#allocation8 + $0x378] sm:$0xff]
        %v525 = vld [vmem:[#allocation8 + $0x380] sm:$0xff]
        %v526 = vld [vmem:[#allocation8 + $0x388] sm:$0xff]
        %v527 = vld [vmem:[#allocation8 + $0x390] sm:$0xff]
        %v528 = vld [vmem:[#allocation8 + $0x398] sm:$0xff]
        %v529 = vld [vmem:[#allocation8 + $0x3a0] sm:$0xff]
        %v530 = vld [vmem:[#allocation8 + $0x3a8] sm:$0xff]
        %v531 = vld [vmem:[#allocation8 + $0x3b0] sm:$0xff]
        %v532 = vld [vmem:[#allocation8 + $0x3b8] sm:$0xff]
        %v533 = vld [vmem:[#allocation8 + $0x3c0] sm:$0xff]
        %v534 = vld [vmem:[#allocation8 + $0x3c8] sm:$0xff]
        %v535 = vld [vmem:[#allocation8 + $0x3d0] sm:$0xff]
        %v536 = vld [vmem:[#allocation8 + $0x3d8] sm:$0xff]
        %v537 = vld [vmem:[#allocation8 + $0x3e0] sm:$0xff]
        %v538 = vld [vmem:[#allocation8 + $0x3e8] sm:$0xff]
        %v539 = vld [vmem:[#allocation8 + $0x3f0] sm:$0xff]
        %v540 = vld [vmem:[#allocation8 + $0x3f8] sm:$0xff]
        %v541 = vld [vmem:[#allocation8 + $0x400] sm:$0xff]
        %v542 = vld [vmem:[#allocation8 + $0x408] sm:$0xff]
        %v543 = vld [vmem:[#allocation8 + $0x410] sm:$0xff]
        %v544 = vld [vmem:[#allocation8 + $0x418] sm:$0xff]
        %v545 = vld [vmem:[#allocation8 + $0x420] sm:$0xff]
        %v546 = vld [vmem:[#allocation8 + $0x428] sm:$0xff]
        %v547 = vld [vmem:[#allocation8 + $0x430] sm:$0xff]
        %v548 = vld [vmem:[#allocation8 + $0x438] sm:$0xff]
        %v549 = vld [vmem:[#allocation8 + $0x440] sm:$0xff]
        %v550 = vld [vmem:[#allocation8 + $0x448] sm:$0xff]
        %v551 = vld [vmem:[#allocation8 + $0x450] sm:$0xff]
        %v552 = vld [vmem:[#allocation8 + $0x458] sm:$0xff]
        %v553 = vld [vmem:[#allocation8 + $0x460] sm:$0xff]
        %v554 = vld [vmem:[#allocation8 + $0x468] sm:$0xff]
        %v555 = vld [vmem:[#allocation8 + $0x470] sm:$0xff]
        %v556 = vld [vmem:[#allocation8 + $0x478] sm:$0xff]
        %v557 = vld [vmem:[#allocation8 + $0x480] sm:$0xff]
        %v558 = vld [vmem:[#allocation8 + $0x488] sm:$0xff]
        %v559 = vld [vmem:[#allocation8 + $0x490] sm:$0xff]
        %v560 = vld [vmem:[#allocation8 + $0x498] sm:$0xff]
        %v561 = vld [vmem:[#allocation8 + $0x4a0] sm:$0xff]
        %v562 = vld [vmem:[#allocation8 + $0x4a8] sm:$0xff]
        %v563 = vld [vmem:[#allocation8 + $0x4b0] sm:$0xff]
        %v564 = vld [vmem:[#allocation8 + $0x4b8] sm:$0xff]
        %v565 = vld [vmem:[#allocation8 + $0x4c0] sm:$0xff]
        %v566 = vld [vmem:[#allocation8 + $0x4c8] sm:$0xff]
        %v567 = vld [vmem:[#allocation8 + $0x4d0] sm:$0xff]
        %v568 = vld [vmem:[#allocation8 + $0x4d8] sm:$0xff]
        %v569 = vld [vmem:[#allocation8 + $0x4e0] sm:$0xff]
        %v570 = vld [vmem:[#allocation8 + $0x4e8] sm:$0xff]
        %v571 = vld [vmem:[#allocation8 + $0x4f0] sm:$0xff]
        %v572 = vld [vmem:[#allocation8 + $0x4f8] sm:$0xff]
        %v573 = vld [vmem:[#allocation8 + $0x500] sm:$0xff]
        %v574 = vld [vmem:[#allocation8 + $0x508] sm:$0xff]
        %v575 = vld [vmem:[#allocation8 + $0x510] sm:$0xff]
        %v576 = vld [vmem:[#allocation8 + $0x518] sm:$0xff]
        %v577 = vld [vmem:[#allocation8 + $0x520] sm:$0xff]
        %v578 = vld [vmem:[#allocation8 + $0x528] sm:$0xff]
        %v579 = vld [vmem:[#allocation8 + $0x530] sm:$0xff]
        %v580 = vld [vmem:[#allocation8 + $0x538] sm:$0xff]
        %v581 = vld [vmem:[#allocation8 + $0x540] sm:$0xff]
        %v582 = vld [vmem:[#allocation8 + $0x548] sm:$0xff]
        %v583 = vld [vmem:[#allocation8 + $0x550] sm:$0xff]
        %v584 = vld [vmem:[#allocation8 + $0x558] sm:$0xff]
        %v585 = vld [vmem:[#allocation8 + $0x560] sm:$0xff]
        %v586 = vld [vmem:[#allocation8 + $0x568] sm:$0xff]
        %v587 = vld [vmem:[#allocation8 + $0x570] sm:$0xff]
        %v588 = vld [vmem:[#allocation8 + $0x578] sm:$0xff]
        %v589 = vld [vmem:[#allocation8 + $0x580] sm:$0xff]
        %v590 = vld [vmem:[#allocation8 + $0x588] sm:$0xff]
        %v591 = vld [vmem:[#allocation8 + $0x590] sm:$0xff]
        %v592 = vld [vmem:[#allocation8 + $0x598] sm:$0xff]
        %v593 = vld [vmem:[#allocation8 + $0x5a0] sm:$0xff]
        %v594 = vld [vmem:[#allocation8 + $0x5a8] sm:$0xff]
        %v595 = vld [vmem:[#allocation8 + $0x5b0] sm:$0xff]
        %v596 = vld [vmem:[#allocation8 + $0x5b8] sm:$0xff]
        %v597 = vld [vmem:[#allocation8 + $0x5c0] sm:$0xff]
        %v598 = vld [vmem:[#allocation8 + $0x5c8] sm:$0xff]
        %v599 = vld [vmem:[#allocation8 + $0x5d0] sm:$0xff]
        %v600 = vld [vmem:[#allocation8 + $0x5d8] sm:$0xff]
        %v601 = vld [vmem:[#allocation8 + $0x5e0] sm:$0xff]
        %v602 = vld [vmem:[#allocation8 + $0x5e8] sm:$0xff]
        %v603 = vld [vmem:[#allocation8 + $0x5f0] sm:$0xff]
        %v604 = vld [vmem:[#allocation8 + $0x5f8] sm:$0xff]
        %v605 = vld [vmem:[#allocation8 + $0x600] sm:$0xff]
        %v606 = vld [vmem:[#allocation8 + $0x608] sm:$0xff]
        %v607 = vld [vmem:[#allocation8 + $0x610] sm:$0xff]
        %v608 = vld [vmem:[#allocation8 + $0x618] sm:$0xff]
        %v609 = vld [vmem:[#allocation8 + $0x620] sm:$0xff]
        %v610 = vld [vmem:[#allocation8 + $0x628] sm:$0xff]
        %v611 = vld [vmem:[#allocation8 + $0x630] sm:$0xff]
        %v612 = vld [vmem:[#allocation8 + $0x638] sm:$0xff]
        %v613 = vld [vmem:[#allocation8 + $0x640] sm:$0xff]
        %v614 = vld [vmem:[#allocation8 + $0x648] sm:$0xff]
        %v615 = vld [vmem:[#allocation8 + $0x650] sm:$0xff]
        %v616 = vld [vmem:[#allocation8 + $0x658] sm:$0xff]
        %v617 = vld [vmem:[#allocation8 + $0x660] sm:$0xff]
        %v618 = vld [vmem:[#allocation8 + $0x668] sm:$0xff]
        %v619 = vld [vmem:[#allocation8 + $0x670] sm:$0xff]
        %v620 = vld [vmem:[#allocation8 + $0x678] sm:$0xff]
        %v621 = vld [vmem:[#allocation8 + $0x680] sm:$0xff]
        %v622 = vld [vmem:[#allocation8 + $0x688] sm:$0xff]
        %v623 = vld [vmem:[#allocation8 + $0x690] sm:$0xff]
        %v624 = vld [vmem:[#allocation8 + $0x698] sm:$0xff]
        %v625 = vld [vmem:[#allocation8 + $0x6a0] sm:$0xff]
        %v626 = vld [vmem:[#allocation8 + $0x6a8] sm:$0xff]
        %v627 = vld [vmem:[#allocation8 + $0x6b0] sm:$0xff]
        %v628 = vld [vmem:[#allocation8 + $0x6b8] sm:$0xff]
        %v629 = vld [vmem:[#allocation8 + $0x6c0] sm:$0xff]
        %v630 = vld [vmem:[#allocation8 + $0x6c8] sm:$0xff]
        %v631 = vld [vmem:[#allocation8 + $0x6d0] sm:$0xff]
        %v632 = vld [vmem:[#allocation8 + $0x6d8] sm:$0xff]
        %v633 = vld [vmem:[#allocation8 + $0x6e0] sm:$0xff]
        %v634 = vld [vmem:[#allocation8 + $0x6e8] sm:$0xff]
        %v635 = vld [vmem:[#allocation8 + $0x6f0] sm:$0xff]
        %v636 = vld [vmem:[#allocation8 + $0x6f8] sm:$0xff]
        %v637 = vld [vmem:[#allocation8 + $0x700] sm:$0xff]
        %v638 = vld [vmem:[#allocation8 + $0x708] sm:$0xff]
        %v639 = vld [vmem:[#allocation8 + $0x710] sm:$0xff]
        %v640 = vld [vmem:[#allocation8 + $0x718] sm:$0xff]
        %v641 = vld [vmem:[#allocation8 + $0x720] sm:$0xff]
        %v642 = vld [vmem:[#allocation8 + $0x728] sm:$0xff]
        %v643 = vld [vmem:[#allocation8 + $0x730] sm:$0xff]
        %v644 = vld [vmem:[#allocation8 + $0x738] sm:$0xff]
        %v645 = vld [vmem:[#allocation8 + $0x740] sm:$0xff]
        %v646 = vld [vmem:[#allocation8 + $0x748] sm:$0xff]
        %v647 = vld [vmem:[#allocation8 + $0x750] sm:$0xff]
        %v648 = vld [vmem:[#allocation8 + $0x758] sm:$0xff]
        %v649 = vld [vmem:[#allocation8 + $0x760] sm:$0xff]
        %v650 = vld [vmem:[#allocation8 + $0x768] sm:$0xff]
        %v651 = vld [vmem:[#allocation8 + $0x770] sm:$0xff]
        %v652 = vld [vmem:[#allocation8 + $0x778] sm:$0xff]
        %v653 = vld [vmem:[#allocation8 + $0x780] sm:$0xff]
        %v654 = vld [vmem:[#allocation8 + $0x788] sm:$0xff]
        %v655 = vld [vmem:[#allocation8 + $0x790] sm:$0xff]
        %v656 = vld [vmem:[#allocation8 + $0x798] sm:$0xff]
        %v657 = vld [vmem:[#allocation8 + $0x7a0] sm:$0xff]
        %v658 = vld [vmem:[#allocation8 + $0x7a8] sm:$0xff]
        %v659 = vld [vmem:[#allocation8 + $0x7b0] sm:$0xff]
        %v660 = vld [vmem:[#allocation8 + $0x7b8] sm:$0xff]
        %v661 = vld [vmem:[#allocation8 + $0x7c0] sm:$0xff]
        %v662 = vld [vmem:[#allocation8 + $0x7c8] sm:$0xff]
        %v663 = vld [vmem:[#allocation8 + $0x7d0] sm:$0xff]
        %v664 = vld [vmem:[#allocation8 + $0x7d8] sm:$0xff]
        %v665 = vld [vmem:[#allocation8 + $0x7e0] sm:$0xff]
        %v666 = vld [vmem:[#allocation8 + $0x7e8] sm:$0xff]
        %v667 = vld [vmem:[#allocation8 + $0x7f0] sm:$0xff]
        %v668 = vld [vmem:[#allocation8 + $0x7f8] sm:$0xff]
        %669 = vmatprep.subr.mxu0 %v414
        %670 = vmatpush1.msra.mxu0 %v413
        %671 = vmatprep.subr.mxu0 %v430
        %672 = vmatpush1.msra.mxu0 %v429
        %673 = vmatprep.subr.mxu0 %v446
        %674 = vmatpush1.msra.mxu0 %v445
        %675 = vmatprep.subr.mxu0 %v462
        %676 = vmatpush1.msra.mxu0 %v461
        %677 = vmatprep.subr.mxu0 %v478
        %678 = vmatpush1.msra.mxu0 %v477
        %679 = vmatprep.subr.mxu0 %v494
        %680 = vmatpush1.msra.mxu0 %v493
        %681 = vmatprep.subr.mxu0 %v510
        %682 = vmatpush1.msra.mxu0 %v509
        %683 = vmatprep.subr.mxu0 %v526
        %684 = vmatpush1.msra.mxu0 %v525
        %685 = vmatprep.subr.mxu0 %v542
        %686 = vmatpush1.msra.mxu0 %v541
        %687 = vmatprep.subr.mxu0 %v558
        %688 = vmatpush1.msra.mxu0 %v557
        %689 = vmatprep.subr.mxu0 %v574
        %690 = vmatpush1.msra.mxu0 %v573
        %691 = vmatprep.subr.mxu0 %v590
        %692 = vmatpush1.msra.mxu0 %v589
        %693 = vmatprep.subr.mxu0 %v606
        %694 = vmatpush1.msra.mxu0 %v605
        %695 = vmatprep.subr.mxu0 %v622
        %696 = vmatpush1.msra.mxu0 %v621
        %697 = vmatprep.subr.mxu0 %v638
        %698 = vmatpush1.msra.mxu0 %v637
        %699 = vmatprep.subr.mxu0 %v654
        %700 = vmatpush1.msra.mxu0 %v653
        %701 = vmatprep.subr.mxu0 0.0
        %702 = vmatpush1.msra.mxu0 0.0
        %703 = vmatprep.subr.mxu0 0.0
        %704 = vmatpush1.msra.mxu0 0.0
        %705 = vmatprep.subr.mxu0 0.0
        %706 = vmatpush1.msra.mxu0 0.0
        %707 = vmatprep.subr.mxu0 0.0
        %708 = vmatpush1.msra.mxu0 0.0
        %709 = vmatprep.subr.mxu0 0.0
        %710 = vmatpush1.msra.mxu0 0.0
        %711 = vmatprep.subr.mxu0 0.0
        %712 = vmatpush1.msra.mxu0 0.0
        %713 = vmatprep.subr.mxu0 0.0
        %714 = vmatpush1.msra.mxu0 0.0
        %715 = vmatprep.subr.mxu0 0.0
        %716 = vmatpush1.msra.mxu0 0.0
        %717 = vmatprep.subr.mxu0 0.0
        %718 = vmatpush1.msra.mxu0 0.0
        %719 = vmatprep.subr.mxu0 0.0
        %720 = vmatpush1.msra.mxu0 0.0
        %721 = vmatprep.subr.mxu0 0.0
        %722 = vmatpush1.msra.mxu0 0.0
        %723 = vmatprep.subr.mxu0 0.0
        %724 = vmatpush1.msra.mxu0 0.0
        %725 = vmatprep.subr.mxu0 0.0
        %726 = vmatpush1.msra.mxu0 0.0
        %727 = vmatprep.subr.mxu0 0.0
        %728 = vmatpush1.msra.mxu0 0.0
        %729 = vmatprep.subr.mxu0 0.0
        %730 = vmatpush1.msra.mxu0 0.0
        %731 = vmatprep.subr.mxu0 0.0
        %732 = vmatpush1.msra.mxu0 0.0
        %733 = vmatprep.mubr.f32.mxu0 0.0
        %734 = vmatmul.mubr.f32.gmra.mrb[0].mxu0 %v412
        %v735 = vpop.f32.mrb[0].mxu0
        %v736 = vadd.f32 0.0, %v735
        %v737 = vpop.f32.mrb[0].mxu0
        %v738 = vadd.f32 0.0, %v737
        %739 = vdwg.mxu0
        %740 = vmatprep.subr.mxu0 %v416
        %741 = vmatpush1.msra.mxu0 %v415
        %742 = vmatprep.subr.mxu0 %v432
        %743 = vmatpush1.msra.mxu0 %v431
        %744 = vmatprep.subr.mxu0 %v448
        %745 = vmatpush1.msra.mxu0 %v447
        %746 = vmatprep.subr.mxu0 %v464
        %747 = vmatpush1.msra.mxu0 %v463
        %748 = vmatprep.subr.mxu0 %v480
        %749 = vmatpush1.msra.mxu0 %v479
        %750 = vmatprep.subr.mxu0 %v496
        %751 = vmatpush1.msra.mxu0 %v495
        %752 = vmatprep.subr.mxu0 %v512
        %753 = vmatpush1.msra.mxu0 %v511
        %754 = vmatprep.subr.mxu0 %v528
        %755 = vmatpush1.msra.mxu0 %v527
        %756 = vmatprep.subr.mxu0 %v544
        %757 = vmatpush1.msra.mxu0 %v543
        %758 = vmatprep.subr.mxu0 %v560
        %759 = vmatpush1.msra.mxu0 %v559
        %760 = vmatprep.subr.mxu0 %v576
        %761 = vmatpush1.msra.mxu0 %v575
        %762 = vmatprep.subr.mxu0 %v592
        %763 = vmatpush1.msra.mxu0 %v591
        %764 = vmatprep.subr.mxu0 %v608
        %765 = vmatpush1.msra.mxu0 %v607
        %766 = vmatprep.subr.mxu0 %v624
        %767 = vmatpush1.msra.mxu0 %v623
        %768 = vmatprep.subr.mxu0 %v640
        %769 = vmatpush1.msra.mxu0 %v639
        %770 = vmatprep.subr.mxu0 %v656
        %771 = vmatpush1.msra.mxu0 %v655
        %772 = vmatprep.subr.mxu0 0.0
        %773 = vmatpush1.msra.mxu0 0.0
        %774 = vmatprep.subr.mxu0 0.0
        %775 = vmatpush1.msra.mxu0 0.0
        %776 = vmatprep.subr.mxu0 0.0
        %777 = vmatpush1.msra.mxu0 0.0
        %778 = vmatprep.subr.mxu0 0.0
        %779 = vmatpush1.msra.mxu0 0.0
        %780 = vmatprep.subr.mxu0 0.0
        %781 = vmatpush1.msra.mxu0 0.0
        %782 = vmatprep.subr.mxu0 0.0
        %783 = vmatpush1.msra.mxu0 0.0
        %784 = vmatprep.subr.mxu0 0.0
        %785 = vmatpush1.msra.mxu0 0.0
        %786 = vmatprep.subr.mxu0 0.0
        %787 = vmatpush1.msra.mxu0 0.0
        %788 = vmatprep.subr.mxu0 0.0
        %789 = vmatpush1.msra.mxu0 0.0
        %790 = vmatprep.subr.mxu0 0.0
        %791 = vmatpush1.msra.mxu0 0.0
        %792 = vmatprep.subr.mxu0 0.0
        %793 = vmatpush1.msra.mxu0 0.0
        %794 = vmatprep.subr.mxu0 0.0
        %795 = vmatpush1.msra.mxu0 0.0
        %796 = vmatprep.subr.mxu0 0.0
        %797 = vmatpush1.msra.mxu0 0.0
        %798 = vmatprep.subr.mxu0 0.0
        %799 = vmatpush1.msra.mxu0 0.0
        %800 = vmatprep.subr.mxu0 0.0
        %801 = vmatpush1.msra.mxu0 0.0
        %802 = vmatprep.subr.mxu0 0.0
        %803 = vmatpush1.msra.mxu0 0.0
        %804 = vmatprep.mubr.f32.mxu0 0.0
        %805 = vmatmul.mubr.f32.gmra.mrb[0].mxu0 %v412
        %v806 = vpop.f32.mrb[0].mxu0
        %v807 = vadd.f32 0.0, %v806
        %v808 = vpop.f32.mrb[0].mxu0
        %v809 = vadd.f32 0.0, %v808
        %810 = vdwg.mxu0
        %811 = vmatprep.subr.mxu0 %v418
        %812 = vmatpush1.msra.mxu0 %v417
        %813 = vmatprep.subr.mxu0 %v434
        %814 = vmatpush1.msra.mxu0 %v433
        %815 = vmatprep.subr.mxu0 %v450
        %816 = vmatpush1.msra.mxu0 %v449
        %817 = vmatprep.subr.mxu0 %v466
        %818 = vmatpush1.msra.mxu0 %v465
        %819 = vmatprep.subr.mxu0 %v482
        %820 = vmatpush1.msra.mxu0 %v481
        %821 = vmatprep.subr.mxu0 %v498
        %822 = vmatpush1.msra.mxu0 %v497
        %823 = vmatprep.subr.mxu0 %v514
        %824 = vmatpush1.msra.mxu0 %v513
        %825 = vmatprep.subr.mxu0 %v530
        %826 = vmatpush1.msra.mxu0 %v529
        %827 = vmatprep.subr.mxu0 %v546
        %828 = vmatpush1.msra.mxu0 %v545
        %829 = vmatprep.subr.mxu0 %v562
        %830 = vmatpush1.msra.mxu0 %v561
        %831 = vmatprep.subr.mxu0 %v578
        %832 = vmatpush1.msra.mxu0 %v577
        %833 = vmatprep.subr.mxu0 %v594
        %834 = vmatpush1.msra.mxu0 %v593
        %835 = vmatprep.subr.mxu0 %v610
        %836 = vmatpush1.msra.mxu0 %v609
        %837 = vmatprep.subr.mxu0 %v626
        %838 = vmatpush1.msra.mxu0 %v625
        %839 = vmatprep.subr.mxu0 %v642
        %840 = vmatpush1.msra.mxu0 %v641
        %841 = vmatprep.subr.mxu0 %v658
        %842 = vmatpush1.msra.mxu0 %v657
        %843 = vmatprep.subr.mxu0 0.0
        %844 = vmatpush1.msra.mxu0 0.0
        %845 = vmatprep.subr.mxu0 0.0
        %846 = vmatpush1.msra.mxu0 0.0
        %847 = vmatprep.subr.mxu0 0.0
        %848 = vmatpush1.msra.mxu0 0.0
        %849 = vmatprep.subr.mxu0 0.0
        %850 = vmatpush1.msra.mxu0 0.0
        %851 = vmatprep.subr.mxu0 0.0
        %852 = vmatpush1.msra.mxu0 0.0
        %853 = vmatprep.subr.mxu0 0.0
        %854 = vmatpush1.msra.mxu0 0.0
        %855 = vmatprep.subr.mxu0 0.0
        %856 = vmatpush1.msra.mxu0 0.0
        %857 = vmatprep.subr.mxu0 0.0
        %858 = vmatpush1.msra.mxu0 0.0
        %859 = vmatprep.subr.mxu0 0.0
        %860 = vmatpush1.msra.mxu0 0.0
        %861 = vmatprep.subr.mxu0 0.0
        %862 = vmatpush1.msra.mxu0 0.0
        %863 = vmatprep.subr.mxu0 0.0
        %864 = vmatpush1.msra.mxu0 0.0
        %865 = vmatprep.subr.mxu0 0.0
        %866 = vmatpush1.msra.mxu0 0.0
        %867 = vmatprep.subr.mxu0 0.0
        %868 = vmatpush1.msra.mxu0 0.0
        %869 = vmatprep.subr.mxu0 0.0
        %870 = vmatpush1.msra.mxu0 0.0
        %871 = vmatprep.subr.mxu0 0.0
        %872 = vmatpush1.msra.mxu0 0.0
        %873 = vmatprep.subr.mxu0 0.0
        %874 = vmatpush1.msra.mxu0 0.0
        %875 = vmatprep.mubr.f32.mxu0 0.0
        %876 = vmatmul.mubr.f32.gmra.mrb[0].mxu0 %v412
        %v877 = vpop.f32.mrb[0].mxu0
        %v878 = vadd.f32 0.0, %v877
        %v879 = vpop.f32.mrb[0].mxu0
        %v880 = vadd.f32 0.0, %v879
        %881 = vdwg.mxu0
        %882 = vmatprep.subr.mxu0 %v420
        %883 = vmatpush1.msra.mxu0 %v419
        %884 = vmatprep.subr.mxu0 %v436
        %885 = vmatpush1.msra.mxu0 %v435
        %886 = vmatprep.subr.mxu0 %v452
        %887 = vmatpush1.msra.mxu0 %v451
        %888 = vmatprep.subr.mxu0 %v468
        %889 = vmatpush1.msra.mxu0 %v467
        %890 = vmatprep.subr.mxu0 %v484
        %891 = vmatpush1.msra.mxu0 %v483
        %892 = vmatprep.subr.mxu0 %v500
        %893 = vmatpush1.msra.mxu0 %v499
        %894 = vmatprep.subr.mxu0 %v516
        %895 = vmatpush1.msra.mxu0 %v515
        %896 = vmatprep.subr.mxu0 %v532
        %897 = vmatpush1.msra.mxu0 %v531
        %898 = vmatprep.subr.mxu0 %v548
        %899 = vmatpush1.msra.mxu0 %v547
        %900 = vmatprep.subr.mxu0 %v564
        %901 = vmatpush1.msra.mxu0 %v563
        %902 = vmatprep.subr.mxu0 %v580
        %903 = vmatpush1.msra.mxu0 %v579
        %904 = vmatprep.subr.mxu0 %v596
        %905 = vmatpush1.msra.mxu0 %v595
        %906 = vmatprep.subr.mxu0 %v612
        %907 = vmatpush1.msra.mxu0 %v611
        %908 = vmatprep.subr.mxu0 %v628
        %909 = vmatpush1.msra.mxu0 %v627
        %910 = vmatprep.subr.mxu0 %v644
        %911 = vmatpush1.msra.mxu0 %v643
        %912 = vmatprep.subr.mxu0 %v660
        %913 = vmatpush1.msra.mxu0 %v659
        %914 = vmatprep.subr.mxu0 0.0
        %915 = vmatpush1.msra.mxu0 0.0
        %916 = vmatprep.subr.mxu0 0.0
        %917 = vmatpush1.msra.mxu0 0.0
        %918 = vmatprep.subr.mxu0 0.0
        %919 = vmatpush1.msra.mxu0 0.0
        %920 = vmatprep.subr.mxu0 0.0
        %921 = vmatpush1.msra.mxu0 0.0
        %922 = vmatprep.subr.mxu0 0.0
        %923 = vmatpush1.msra.mxu0 0.0
        %924 = vmatprep.subr.mxu0 0.0
        %925 = vmatpush1.msra.mxu0 0.0
        %926 = vmatprep.subr.mxu0 0.0
        %927 = vmatpush1.msra.mxu0 0.0
        %928 = vmatprep.subr.mxu0 0.0
        %929 = vmatpush1.msra.mxu0 0.0
        %930 = vmatprep.subr.mxu0 0.0
        %931 = vmatpush1.msra.mxu0 0.0
        %932 = vmatprep.subr.mxu0 0.0
        %933 = vmatpush1.msra.mxu0 0.0
        %934 = vmatprep.subr.mxu0 0.0
        %935 = vmatpush1.msra.mxu0 0.0
        %936 = vmatprep.subr.mxu0 0.0
        %937 = vmatpush1.msra.mxu0 0.0
        %938 = vmatprep.subr.mxu0 0.0
        %939 = vmatpush1.msra.mxu0 0.0
        %940 = vmatprep.subr.mxu0 0.0
        %941 = vmatpush1.msra.mxu0 0.0
        %942 = vmatprep.subr.mxu0 0.0
        %943 = vmatpush1.msra.mxu0 0.0
        %944 = vmatprep.subr.mxu0 0.0
        %945 = vmatpush1.msra.mxu0 0.0
        %946 = vmatprep.mubr.f32.mxu0 0.0
        %947 = vmatmul.mubr.f32.gmra.mrb[0].mxu0 %v412
        %v948 = vpop.f32.mrb[0].mxu0
        %v949 = vadd.f32 0.0, %v948
        %v950 = vpop.f32.mrb[0].mxu0
        %v951 = vadd.f32 0.0, %v950
        %952 = vdwg.mxu0
        %953 = vmatprep.subr.mxu0 %v422
        %954 = vmatpush1.msra.mxu0 %v421
        %955 = vmatprep.subr.mxu0 %v438
        %956 = vmatpush1.msra.mxu0 %v437
        %957 = vmatprep.subr.mxu0 %v454
        %958 = vmatpush1.msra.mxu0 %v453
        %959 = vmatprep.subr.mxu0 %v470
        %960 = vmatpush1.msra.mxu0 %v469
        %961 = vmatprep.subr.mxu0 %v486
        %962 = vmatpush1.msra.mxu0 %v485
        %963 = vmatprep.subr.mxu0 %v502
        %964 = vmatpush1.msra.mxu0 %v501
        %965 = vmatprep.subr.mxu0 %v518
        %966 = vmatpush1.msra.mxu0 %v517
        %967 = vmatprep.subr.mxu0 %v534
        %968 = vmatpush1.msra.mxu0 %v533
        %969 = vmatprep.subr.mxu0 %v550
        %970 = vmatpush1.msra.mxu0 %v549
        %971 = vmatprep.subr.mxu0 %v566
        %972 = vmatpush1.msra.mxu0 %v565
        %973 = vmatprep.subr.mxu0 %v582
        %974 = vmatpush1.msra.mxu0 %v581
        %975 = vmatprep.subr.mxu0 %v598
        %976 = vmatpush1.msra.mxu0 %v597
        %977 = vmatprep.subr.mxu0 %v614
        %978 = vmatpush1.msra.mxu0 %v613
        %979 = vmatprep.subr.mxu0 %v630
        %980 = vmatpush1.msra.mxu0 %v629
        %981 = vmatprep.subr.mxu0 %v646
        %982 = vmatpush1.msra.mxu0 %v645
        %983 = vmatprep.subr.mxu0 %v662
        %984 = vmatpush1.msra.mxu0 %v661
        %985 = vmatprep.subr.mxu0 0.0
        %986 = vmatpush1.msra.mxu0 0.0
        %987 = vmatprep.subr.mxu0 0.0
        %988 = vmatpush1.msra.mxu0 0.0
        %989 = vmatprep.subr.mxu0 0.0
        %990 = vmatpush1.msra.mxu0 0.0
        %991 = vmatprep.subr.mxu0 0.0
        %992 = vmatpush1.msra.mxu0 0.0
        %993 = vmatprep.subr.mxu0 0.0
        %994 = vmatpush1.msra.mxu0 0.0
        %995 = vmatprep.subr.mxu0 0.0
        %996 = vmatpush1.msra.mxu0 0.0
        %997 = vmatprep.subr.mxu0 0.0
        %998 = vmatpush1.msra.mxu0 0.0
        %999 = vmatprep.subr.mxu0 0.0
        %1000 = vmatpush1.msra.mxu0 0.0
        %1001 = vmatprep.subr.mxu0 0.0
        %1002 = vmatpush1.msra.mxu0 0.0
        %1003 = vmatprep.subr.mxu0 0.0
        %1004 = vmatpush1.msra.mxu0 0.0
        %1005 = vmatprep.subr.mxu0 0.0
        %1006 = vmatpush1.msra.mxu0 0.0
        %1007 = vmatprep.subr.mxu0 0.0
        %1008 = vmatpush1.msra.mxu0 0.0
        %1009 = vmatprep.subr.mxu0 0.0
        %1010 = vmatpush1.msra.mxu0 0.0
        %1011 = vmatprep.subr.mxu0 0.0
        %1012 = vmatpush1.msra.mxu0 0.0
        %1013 = vmatprep.subr.mxu0 0.0
        %1014 = vmatpush1.msra.mxu0 0.0
        %1015 = vmatprep.subr.mxu0 0.0
        %1016 = vmatpush1.msra.mxu0 0.0
        %1017 = vmatprep.mubr.f32.mxu0 0.0
        %1018 = vmatmul.mubr.f32.gmra.mrb[0].mxu0 %v412
        %v1019 = vpop.f32.mrb[0].mxu0
        %v1020 = vadd.f32 0.0, %v1019
        %v1021 = vpop.f32.mrb[0].mxu0
        %v1022 = vadd.f32 0.0, %v1021
        %1023 = vdwg.mxu0
        %1024 = vmatprep.subr.mxu0 %v424
        %1025 = vmatpush1.msra.mxu0 %v423
        %1026 = vmatprep.subr.mxu0 %v440
        %1027 = vmatpush1.msra.mxu0 %v439
        %1028 = vmatprep.subr.mxu0 %v456
        %1029 = vmatpush1.msra.mxu0 %v455
        %1030 = vmatprep.subr.mxu0 %v472
        %1031 = vmatpush1.msra.mxu0 %v471
        %1032 = vmatprep.subr.mxu0 %v488
        %1033 = vmatpush1.msra.mxu0 %v487
        %1034 = vmatprep.subr.mxu0 %v504
        %1035 = vmatpush1.msra.mxu0 %v503
        %1036 = vmatprep.subr.mxu0 %v520
        %1037 = vmatpush1.msra.mxu0 %v519
        %1038 = vmatprep.subr.mxu0 %v536
        %1039 = vmatpush1.msra.mxu0 %v535
        %1040 = vmatprep.subr.mxu0 %v552
        %1041 = vmatpush1.msra.mxu0 %v551
        %1042 = vmatprep.subr.mxu0 %v568
        %1043 = vmatpush1.msra.mxu0 %v567
        %1044 = vmatprep.subr.mxu0 %v584
        %1045 = vmatpush1.msra.mxu0 %v583
        %1046 = vmatprep.subr.mxu0 %v600
        %1047 = vmatpush1.msra.mxu0 %v599
        %1048 = vmatprep.subr.mxu0 %v616
        %1049 = vmatpush1.msra.mxu0 %v615
        %1050 = vmatprep.subr.mxu0 %v632
        %1051 = vmatpush1.msra.mxu0 %v631
        %1052 = vmatprep.subr.mxu0 %v648
        %1053 = vmatpush1.msra.mxu0 %v647
        %1054 = vmatprep.subr.mxu0 %v664
        %1055 = vmatpush1.msra.mxu0 %v663
        %1056 = vmatprep.subr.mxu0 0.0
        %1057 = vmatpush1.msra.mxu0 0.0
        %1058 = vmatprep.subr.mxu0 0.0
        %1059 = vmatpush1.msra.mxu0 0.0
        %1060 = vmatprep.subr.mxu0 0.0
        %1061 = vmatpush1.msra.mxu0 0.0
        %1062 = vmatprep.subr.mxu0 0.0
        %1063 = vmatpush1.msra.mxu0 0.0
        %1064 = vmatprep.subr.mxu0 0.0
        %1065 = vmatpush1.msra.mxu0 0.0
        %1066 = vmatprep.subr.mxu0 0.0
        %1067 = vmatpush1.msra.mxu0 0.0
        %1068 = vmatprep.subr.mxu0 0.0
        %1069 = vmatpush1.msra.mxu0 0.0
        %1070 = vmatprep.subr.mxu0 0.0
        %1071 = vmatpush1.msra.mxu0 0.0
        %1072 = vmatprep.subr.mxu0 0.0
        %1073 = vmatpush1.msra.mxu0 0.0
        %1074 = vmatprep.subr.mxu0 0.0
        %1075 = vmatpush1.msra.mxu0 0.0
        %1076 = vmatprep.subr.mxu0 0.0
        %1077 = vmatpush1.msra.mxu0 0.0
        %1078 = vmatprep.subr.mxu0 0.0
        %1079 = vmatpush1.msra.mxu0 0.0
        %1080 = vmatprep.subr.mxu0 0.0
        %1081 = vmatpush1.msra.mxu0 0.0
        %1082 = vmatprep.subr.mxu0 0.0
        %1083 = vmatpush1.msra.mxu0 0.0
        %1084 = vmatprep.subr.mxu0 0.0
        %1085 = vmatpush1.msra.mxu0 0.0
        %1086 = vmatprep.subr.mxu0 0.0
        %1087 = vmatpush1.msra.mxu0 0.0
        %1088 = vmatprep.mubr.f32.mxu0 0.0
        %1089 = vmatmul.mubr.f32.gmra.mrb[0].mxu0 %v412
        %v1090 = vpop.f32.mrb[0].mxu0
        %v1091 = vadd.f32 0.0, %v1090
        %v1092 = vpop.f32.mrb[0].mxu0
        %v1093 = vadd.f32 0.0, %v1092
        %1094 = vdwg.mxu0
        %1095 = vmatprep.subr.mxu0 %v426
        %1096 = vmatpush1.msra.mxu0 %v425
        %1097 = vmatprep.subr.mxu0 %v442
        %1098 = vmatpush1.msra.mxu0 %v441
        %1099 = vmatprep.subr.mxu0 %v458
        %1100 = vmatpush1.msra.mxu0 %v457
        %1101 = vmatprep.subr.mxu0 %v474
        %1102 = vmatpush1.msra.mxu0 %v473
        %1103 = vmatprep.subr.mxu0 %v490
        %1104 = vmatpush1.msra.mxu0 %v489
        %1105 = vmatprep.subr.mxu0 %v506
        %1106 = vmatpush1.msra.mxu0 %v505
        %1107 = vmatprep.subr.mxu0 %v522
        %1108 = vmatpush1.msra.mxu0 %v521
        %1109 = vmatprep.subr.mxu0 %v538
        %1110 = vmatpush1.msra.mxu0 %v537
        %1111 = vmatprep.subr.mxu0 %v554
        %1112 = vmatpush1.msra.mxu0 %v553
        %1113 = vmatprep.subr.mxu0 %v570
        %1114 = vmatpush1.msra.mxu0 %v569
        %1115 = vmatprep.subr.mxu0 %v586
        %1116 = vmatpush1.msra.mxu0 %v585
        %1117 = vmatprep.subr.mxu0 %v602
        %1118 = vmatpush1.msra.mxu0 %v601
        %1119 = vmatprep.subr.mxu0 %v618
        %1120 = vmatpush1.msra.mxu0 %v617
        %1121 = vmatprep.subr.mxu0 %v634
        %1122 = vmatpush1.msra.mxu0 %v633
        %1123 = vmatprep.subr.mxu0 %v650
        %1124 = vmatpush1.msra.mxu0 %v649
        %1125 = vmatprep.subr.mxu0 %v666
        %1126 = vmatpush1.msra.mxu0 %v665
        %1127 = vmatprep.subr.mxu0 0.0
        %1128 = vmatpush1.msra.mxu0 0.0
        %1129 = vmatprep.subr.mxu0 0.0
        %1130 = vmatpush1.msra.mxu0 0.0
        %1131 = vmatprep.subr.mxu0 0.0
        %1132 = vmatpush1.msra.mxu0 0.0
        %1133 = vmatprep.subr.mxu0 0.0
        %1134 = vmatpush1.msra.mxu0 0.0
        %1135 = vmatprep.subr.mxu0 0.0
        %1136 = vmatpush1.msra.mxu0 0.0
        %1137 = vmatprep.subr.mxu0 0.0
        %1138 = vmatpush1.msra.mxu0 0.0
        %1139 = vmatprep.subr.mxu0 0.0
        %1140 = vmatpush1.msra.mxu0 0.0
        %1141 = vmatprep.subr.mxu0 0.0
        %1142 = vmatpush1.msra.mxu0 0.0
        %1143 = vmatprep.subr.mxu0 0.0
        %1144 = vmatpush1.msra.mxu0 0.0
        %1145 = vmatprep.subr.mxu0 0.0
        %1146 = vmatpush1.msra.mxu0 0.0
        %1147 = vmatprep.subr.mxu0 0.0
        %1148 = vmatpush1.msra.mxu0 0.0
        %1149 = vmatprep.subr.mxu0 0.0
        %1150 = vmatpush1.msra.mxu0 0.0
        %1151 = vmatprep.subr.mxu0 0.0
        %1152 = vmatpush1.msra.mxu0 0.0
        %1153 = vmatprep.subr.mxu0 0.0
        %1154 = vmatpush1.msra.mxu0 0.0
        %1155 = vmatprep.subr.mxu0 0.0
        %1156 = vmatpush1.msra.mxu0 0.0
        %1157 = vmatprep.subr.mxu0 0.0
        %1158 = vmatpush1.msra.mxu0 0.0
        %1159 = vmatprep.mubr.f32.mxu0 0.0
        %1160 = vmatmul.mubr.f32.gmra.mrb[0].mxu0 %v412
        %v1161 = vpop.f32.mrb[0].mxu0
        %v1162 = vadd.f32 0.0, %v1161
        %v1163 = vpop.f32.mrb[0].mxu0
        %v1164 = vadd.f32 0.0, %v1163
        %1165 = vdwg.mxu0
        %1166 = vmatprep.subr.mxu0 %v428
        %1167 = vmatpush1.msra.mxu0 %v427
        %1168 = vmatprep.subr.mxu0 %v444
        %1169 = vmatpush1.msra.mxu0 %v443
        %1170 = vmatprep.subr.mxu0 %v460
        %1171 = vmatpush1.msra.mxu0 %v459
        %1172 = vmatprep.subr.mxu0 %v476
        %1173 = vmatpush1.msra.mxu0 %v475
        %1174 = vmatprep.subr.mxu0 %v492
        %1175 = vmatpush1.msra.mxu0 %v491
        %1176 = vmatprep.subr.mxu0 %v508
        %1177 = vmatpush1.msra.mxu0 %v507
        %1178 = vmatprep.subr.mxu0 %v524
        %1179 = vmatpush1.msra.mxu0 %v523
        %1180 = vmatprep.subr.mxu0 %v540
        %1181 = vmatpush1.msra.mxu0 %v539
        %1182 = vmatprep.subr.mxu0 %v556
        %1183 = vmatpush1.msra.mxu0 %v555
        %1184 = vmatprep.subr.mxu0 %v572
        %1185 = vmatpush1.msra.mxu0 %v571
        %1186 = vmatprep.subr.mxu0 %v588
        %1187 = vmatpush1.msra.mxu0 %v587
        %1188 = vmatprep.subr.mxu0 %v604
        %1189 = vmatpush1.msra.mxu0 %v603
        %1190 = vmatprep.subr.mxu0 %v620
        %1191 = vmatpush1.msra.mxu0 %v619
        %1192 = vmatprep.subr.mxu0 %v636
        %1193 = vmatpush1.msra.mxu0 %v635
        %1194 = vmatprep.subr.mxu0 %v652
        %1195 = vmatpush1.msra.mxu0 %v651
        %1196 = vmatprep.subr.mxu0 %v668
        %1197 = vmatpush1.msra.mxu0 %v667
        %1198 = vmatprep.subr.mxu0 0.0
        %1199 = vmatpush1.msra.mxu0 0.0
        %1200 = vmatprep.subr.mxu0 0.0
        %1201 = vmatpush1.msra.mxu0 0.0
        %1202 = vmatprep.subr.mxu0 0.0
        %1203 = vmatpush1.msra.mxu0 0.0
        %1204 = vmatprep.subr.mxu0 0.0
        %1205 = vmatpush1.msra.mxu0 0.0
        %1206 = vmatprep.subr.mxu0 0.0
        %1207 = vmatpush1.msra.mxu0 0.0
        %1208 = vmatprep.subr.mxu0 0.0
        %1209 = vmatpush1.msra.mxu0 0.0
        %1210 = vmatprep.subr.mxu0 0.0
        %1211 = vmatpush1.msra.mxu0 0.0
        %1212 = vmatprep.subr.mxu0 0.0
        %1213 = vmatpush1.msra.mxu0 0.0
        %1214 = vmatprep.subr.mxu0 0.0
        %1215 = vmatpush1.msra.mxu0 0.0
        %1216 = vmatprep.subr.mxu0 0.0
        %1217 = vmatpush1.msra.mxu0 0.0
        %1218 = vmatprep.subr.mxu0 0.0
        %1219 = vmatpush1.msra.mxu0 0.0
        %1220 = vmatprep.subr.mxu0 0.0
        %1221 = vmatpush1.msra.mxu0 0.0
        %1222 = vmatprep.subr.mxu0 0.0
        %1223 = vmatpush1.msra.mxu0 0.0
        %1224 = vmatprep.subr.mxu0 0.0
        %1225 = vmatpush1.msra.mxu0 0.0
        %1226 = vmatprep.subr.mxu0 0.0
        %1227 = vmatpush1.msra.mxu0 0.0
        %1228 = vmatprep.subr.mxu0 0.0
        %1229 = vmatpush1.msra.mxu0 0.0
        %1230 = vmatprep.mubr.f32.mxu0 0.0
        %1231 = vmatmul.mubr.f32.gmra.mrb[0].mxu0 %v412
        %v1232 = vpop.f32.mrb[0].mxu0
        %v1233 = vadd.f32 0.0, %v1232
        %v1234 = vpop.f32.mrb[0].mxu0
        %v1235 = vadd.f32 0.0, %v1234
        %1236 = vdwg.mxu0
        %1237 = vst [vmem:[%s291] sm:$0xff] %v736
        %1238 = vst [vmem:[%s291 + $0x8] sm:$0xff] %v738
        %1239 = vst [vmem:[%s291 + $0x10] sm:$0xff] %v807
        %1240 = vst [vmem:[%s291 + $0x18] sm:$0xff] %v809
        %1241 = vst [vmem:[%s291 + $0x20] sm:$0xff] %v878
        %1242 = vst [vmem:[%s291 + $0x28] sm:$0xff] %v880
        %1243 = vst [vmem:[%s291 + $0x30] sm:$0xff] %v949
        %1244 = vst [vmem:[%s291 + $0x38] sm:$0xff] %v951
        %1245 = vst [vmem:[%s291 + $0x40] sm:$0xff] %v1020
        %1246 = vst [vmem:[%s291 + $0x48] sm:$0xff] %v1022
        %1247 = vst [vmem:[%s291 + $0x50] sm:$0xff] %v1091
        %1248 = vst [vmem:[%s291 + $0x58] sm:$0xff] %v1093
        %1249 = vst [vmem:[%s291 + $0x60] sm:$0xff] %v1162
        %1250 = vst [vmem:[%s291 + $0x68] sm:$0xff] %v1164
        %1251 = vst [vmem:[%s291 + $0x70] sm:$0xff] %v1233
        %1252 = vst [vmem:[%s291 + $0x78] sm:$0xff] %v1235
        %p1253 = scmp.eq.s32.totalorder %s21, 0
        // Predicated region
        $region57: #{tpu_custom_call.1} parent=39 // pred_check
          %p1254 = pneg %p1253
        $region58: #{tpu_custom_call.1} parent=39 // pred_check_branch
          %1256 = sbr.rel (%p1254) target = $region60
        $region59: #{tpu_custom_call.1} parent=39 // pred_region
          %v1257 = vld [vmem:[#allocation2] sm:$0xff]
          %vm1258 = vcmask 523264
          %1259 = vst.msk [vmem:[%s291] sm:$0xff] %vm1258, %v1257
        $region60: #{tpu_custom_call.1} parent=39 // pred_fallthru
          _
        %s1260 = sand.u32 %s144, 1
        %s1261 = scalar_lea.sflag [#allocation4], %s1260
        %s1262 = sand.u32 %s144, 1
        %s1263 = smul.addr %s1262, 128
        %s1264 = scalar_lea.vmem [#allocation9], %s1263
        // Predicated region
        $region61: #{tpu_custom_call.1} parent=39 // pred_check
          %p1265 = pneg %p154
        $region62: #{tpu_custom_call.1} parent=39 // pred_check_branch
          %1267 = sbr.rel (%p1265) target = $region64
        $region63: #{tpu_custom_call.1} parent=39 // pred_region
          %s1268 = smul.u32 16, %s21
          %s1270 = ssub.s32 2048, 2048
          %1271 = vsyncadd %s1261, %s1270
          %s1272 = smul.addr %s1268, 128
          %s1273 = scalar_lea.hbm %s5, %s1272
          %s1275 = sshll.u32 %s1264, 4
          %s1276 = int_to_ptr.vmem [resolvable:$true] %s1275
          %1278 = dma.vmem_to_hbm [thread:$0]  %s1276, 2048, %s1273, %s1261
        $region64: #{tpu_custom_call.1} parent=39 // pred_fallthru
          _
      $region40: #{tpu_custom_call.1} parent=5 // pred_fallthru
        _
      %p1279 = scmp.le.s32.totalorder 2, %s16
      // Predicated region
      $region65: #{tpu_custom_call.1} parent=5 // pred_check
        %p1280 = pneg %p1279
      $region66: #{tpu_custom_call.1} parent=5 // pred_check_branch
        %1282 = sbr.rel (%p1280) target = $region68
      $region67: #{tpu_custom_call.1} parent=5 // pred_region
        %s1283 = ssub.s32 %s16, 2
        // Predicated region
        $region69: #{tpu_custom_call.1} parent=67 // pred_check
          %p1284 = pneg %p160
        $region70: #{tpu_custom_call.1} parent=67 // pred_check_branch
          %1286 = sbr.rel (%p1284) target = $region72
        $region71: #{tpu_custom_call.1} parent=67 // pred_region
          %s1287 = sand.u32 %s145, 1
          %s1288 = scalar_lea.sflag [#allocation4], %s1287
          %s1289 = sand.u32 %s145, 1
          %s1290 = smul.addr %s1289, 128
          %s1291 = scalar_lea.vmem [#allocation9], %s1290
          %1292 = dma.done %s1288, 2048
        $region72: #{tpu_custom_call.1} parent=67 // pred_fallthru
          _
      $region68: #{tpu_custom_call.1} parent=5 // pred_fallthru
        _
    $region6: #{tpu_custom_call.1} parent=1 // loop_footer
      %s20 = sadd.s32 1, %s16
    $region7: #{tpu_custom_call.1} parent=1 // loop_footer_branch
      %15 = sbr.rel target = $region3
    $region8: #{tpu_custom_call.1} parent=1 // loop_exit
      _
    %1293 = vsyncpa [#allocation3], 1
    %s1294 = scalar_lea.sflag [#allocation3], 1
    %1295 = vsyncpa %s1294, 1
    %1296 = vsyncpa [#allocation6], 1
    %1297 = vsyncpa [#allocation4], 1
    %s1298 = scalar_lea.sflag [#allocation4], 1
    %1299 = vsyncpa %s1298, 1

</llo_original>
